<compile_context>
chip_gen: v7x
topology: tpu7x:2x2x1
jax: 0.10.0
libtpu: 0.0.40
codegen_flags: <defaults>
</compile_context>

<pallas_src>
import jax
import jax.numpy as jnp
from jax.experimental import pallas as pl
from jax.experimental.pallas import tpu as pltpu

Z_DIM = 32                 # args.z_dim (synthetic small choice)
HIDDEN = (64, 128, 256, 512)
OUT_DIM = 28 * 28          # 784
LANE = 128
SUBLANE = 8
TILE_B_MAX = 1024          # large tiles amortize per-grid-step overhead
SPLIT_THRESHOLD = 512      # force >=2 grid steps at/above this batch (v7x megacore)


def _round_up(x, m):
    return ((x + m - 1) // m) * m


# Lane-dense (padded) layer widths used inside the kernel.
H1_PAD = _round_up(HIDDEN[0], LANE)      # 64  -> 128
OUT_PAD = _round_up(OUT_DIM, LANE)       # 784 -> 896
DIMS_PAD = (Z_DIM, H1_PAD, HIDDEN[1], HIDDEN[2], HIDDEN[3], OUT_PAD)


def _generator_kernel(z_ref,
                      w1_ref, b1_ref, w2_ref, b2_ref, w3_ref, b3_ref,
                      w4_ref, b4_ref, w5_ref, b5_ref,
                      out_ref):
    """Fused 5-layer MLP on one batch tile.

    Weights/biases are VMEM-resident across the batch grid (constant index_map);
    inter-layer activations are held bf16; dots run bf16 x bf16 -> f32 on the MXU.
    """
    def dense(x_bf16, w_ref, b_ref):
        return jnp.dot(x_bf16, w_ref[...],
                       preferred_element_type=jnp.float32) + b_ref[...]

    def relu_bf16(x_f32):
        # Same cast the next matmul needs, moved before the activation spill:
        # halves VMEM spill/reload bytes for the 256/512-wide intermediates.
        return jnp.maximum(x_f32, 0.0).astype(jnp.bfloat16)

    x = z_ref[...].astype(jnp.bfloat16)
    x = relu_bf16(dense(x, w1_ref, b1_ref))
    x = relu_bf16(dense(x, w2_ref, b2_ref))
    x = relu_bf16(dense(x, w3_ref, b3_ref))
    x = relu_bf16(dense(x, w4_ref, b4_ref))
    out_ref[...] = jnp.tanh(dense(x, w5_ref, b5_ref))


def init_params(key):
    """PyTorch nn.Linear init: U(-1/sqrt(fan_in), 1/sqrt(fan_in)); W stored (in, out)."""
    dims = (Z_DIM,) + HIDDEN + (OUT_DIM,)
    params = []
    for i in range(len(dims) - 1):
        fan_in, fan_out = dims[i], dims[i + 1]
        key, kw, kb = jax.random.split(key, 3)
        bound = 1.0 / jnp.sqrt(fan_in)
        w = jax.random.uniform(kw, (fan_in, fan_out), jnp.float32, -bound, bound)
        b = jax.random.uniform(kb, (fan_out,), jnp.float32, -bound, bound)
        params.append((w, b))
    return params


def pack_params(params):
    """Zero-pad to lane-dense shapes, cast weights to bf16, biases to (1, N) f32.

    Zero padding is numerically exact: padded hidden-1 columns compute
    ReLU(0 + 0) = 0 and the matching zeroed w2 rows contribute nothing; padded
    output columns are tanh(0) = 0 and are sliced off in the wrapper.
    """
    packed = []
    for li, (w, b) in enumerate(params):
        fan_in, fan_out = DIMS_PAD[li], DIMS_PAD[li + 1]
        w_p = jnp.zeros((fan_in, fan_out), jnp.float32)
        w_p = w_p.at[: w.shape[0], : w.shape[1]].set(w)
        b_p = jnp.zeros((1, fan_out), jnp.float32)
        b_p = b_p.at[0, : b.shape[0]].set(b)
        packed.append((w_p.astype(jnp.bfloat16), b_p))
    return packed


def _choose_tiling(B):
    """Pick (tile_b, b_pad) that (a) keeps tiles large, (b) gives >=2 grid
    steps for large batches (v7x megacore), (c) minimizes batch padding."""
    num_tiles = max(1, -(-B // TILE_B_MAX))                 # ceil(B / TILE_B_MAX)
    if B >= SPLIT_THRESHOLD and num_tiles < 2:
        num_tiles = 2
    tile_b = _round_up(-(-B // num_tiles), SUBLANE)         # ceil(B / num_tiles) -> x8
    b_pad = tile_b * num_tiles                              # <= 7 padded rows per tile
    return tile_b, b_pad


def generator_forward(z, packed_params):
    """z: (B, Z_DIM) f32.  Returns (B, 1, 28, 28) f32 (NCHW, like PyTorch)."""
    B = z.shape[0]
    tile_b, b_pad = _choose_tiling(B)
    if b_pad != B:
        z = jnp.pad(z, ((0, b_pad - B), (0, 0)))

    flat_args = [z]
    in_specs = [pl.BlockSpec((tile_b, Z_DIM), lambda i: (i, 0))]
    for (w, b) in packed_params:
        flat_args += [w, b]
        # Constant index_map -> DMA'd once, VMEM-resident across all batch tiles.
        in_specs += [pl.BlockSpec(w.shape, lambda i: (0, 0)),
                     pl.BlockSpec(b.shape, lambda i: (0, 0))]

    flops = 2 * b_pad * sum(DIMS_PAD[i] * DIMS_PAD[i + 1] for i in range(5))
    bytes_weights = sum(int(w.size) * 2 + int(b.size) * 4 for (w, b) in packed_params)
    bytes_acts = b_pad * (Z_DIM + OUT_PAD) * 4
    cost = pl.CostEstimate(flops=flops,
                           transcendentals=b_pad * OUT_PAD,
                           bytes_accessed=bytes_weights + bytes_acts)

    out_flat = pl.pallas_call(
        _generator_kernel,
        out_shape=jax.ShapeDtypeStruct((b_pad, OUT_PAD), jnp.float32),
        grid_spec=pltpu.PrefetchScalarGridSpec(
            num_scalar_prefetch=0,
            grid=(b_pad // tile_b,),
            in_specs=in_specs,
            out_specs=pl.BlockSpec((tile_b, OUT_PAD), lambda i: (i, 0)),
        ),
        compiler_params=pltpu.CompilerParams(
            dimension_semantics=("parallel",),
            # Large tiles (up to 1024 x 896 f32 out, double-buffered) plus
            # ~2.4 MiB of double-buffered weights: raise past v5e's 16 MiB default.
            vmem_limit_bytes=32 * 1024 * 1024),
        cost_estimate=cost,
    )(*flat_args)

    # PyTorch: self.tanh(x).view(-1, 1, 28, 28); drop batch/lane padding first.
    return out_flat[:B, :OUT_DIM].reshape(-1, 1, 28, 28)


if __name__ == "__main__":
    key = jax.random.PRNGKey(0)
    key, zkey = jax.random.split(key)

    batch = 8
    z = jax.random.normal(zkey, (batch, Z_DIM), jnp.float32)
    params = init_params(key)
    packed = pack_params(params)

    out = generator_forward(z, packed)
    jax.block_until_ready(out)

    # Reference in plain JAX using the exact same bf16 weights / bf16 activations
    # / f32 accumulation path as the kernel.
    x = z.astype(jnp.bfloat16)
    y = None
    for i, (w, b) in enumerate(packed):
        y = jnp.dot(x, w, preferred_element_type=jnp.float32) + b
        if i < len(packed) - 1:
            x = jnp.maximum(y, 0.0).astype(jnp.bfloat16)
        else:
            y = jnp.tanh(y)
    ref = y[:, :OUT_DIM].reshape(-1, 1, 28, 28)

    assert out.shape == (batch, 1, 28, 28)
    err = float(jnp.max(jnp.abs(out - ref)))
    assert jnp.allclose(out, ref, atol=1e-2, rtol=1e-2), err

    print("KERNEL_OK")
</pallas_src>

<mosaic_0001>
module attributes {stable_mosaic.version = 11 : i64} {
  func.func @_generator_kernel(%arg0: i32, %arg1: memref<8x32xf32, #tpu.memory_space<vmem>>, %arg2: memref<32x128xbf16, #tpu.memory_space<vmem>>, %arg3: memref<1x128xf32, #tpu.memory_space<vmem>>, %arg4: memref<128x128xbf16, #tpu.memory_space<vmem>>, %arg5: memref<1x128xf32, #tpu.memory_space<vmem>>, %arg6: memref<128x256xbf16, #tpu.memory_space<vmem>>, %arg7: memref<1x256xf32, #tpu.memory_space<vmem>>, %arg8: memref<256x512xbf16, #tpu.memory_space<vmem>>, %arg9: memref<1x512xf32, #tpu.memory_space<vmem>>, %arg10: memref<512x896xbf16, #tpu.memory_space<vmem>>, %arg11: memref<1x896xf32, #tpu.memory_space<vmem>>, %arg12: memref<8x896xf32, #tpu.memory_space<vmem>>) attributes {dimension_semantics = [#tpu.dimension_semantics<parallel>], iteration_bounds = array<i64: 1>, scalar_prefetch = 0 : i64, scratch_operands = 0 : i64, tpu.core_type = #tpu.core_type<tc>, window_params = [{transform_indices = @transform_0, window_bounds = array<i64: 8, 32>}, {pipeline_mode = #tpu.pipeline_mode<synchronous>, transform_indices = @transform_1, window_bounds = array<i64: 32, 128>}, {pipeline_mode = #tpu.pipeline_mode<synchronous>, transform_indices = @transform_2, window_bounds = array<i64: 1, 128>}, {pipeline_mode = #tpu.pipeline_mode<synchronous>, transform_indices = @transform_3, window_bounds = array<i64: 128, 128>}, {pipeline_mode = #tpu.pipeline_mode<synchronous>, transform_indices = @transform_4, window_bounds = array<i64: 1, 128>}, {pipeline_mode = #tpu.pipeline_mode<synchronous>, transform_indices = @transform_5, window_bounds = array<i64: 128, 256>}, {pipeline_mode = #tpu.pipeline_mode<synchronous>, transform_indices = @transform_6, window_bounds = array<i64: 1, 256>}, {pipeline_mode = #tpu.pipeline_mode<synchronous>, transform_indices = @transform_7, window_bounds = array<i64: 256, 512>}, {pipeline_mode = #tpu.pipeline_mode<synchronous>, transform_indices = @transform_8, window_bounds = array<i64: 1, 512>}, {pipeline_mode = #tpu.pipeline_mode<synchronous>, transform_indices = @transform_9, window_bounds = array<i64: 512, 896>}, {pipeline_mode = #tpu.pipeline_mode<synchronous>, transform_indices = @transform_10, window_bounds = array<i64: 1, 896>}, {transform_indices = @transform_11, window_bounds = array<i64: 8, 896>}]} {
    %c0 = arith.constant 0 : index
    %c0_0 = arith.constant 0 : index
    %0 = vector.load %arg1[%c0, %c0_0] : memref<8x32xf32, #tpu.memory_space<vmem>>, vector<8x32xf32>
    %1 = arith.truncf %0 : vector<8x32xf32> to vector<8x32xbf16>
    %c0_1 = arith.constant 0 : index
    %c0_2 = arith.constant 0 : index
    %2 = vector.load %arg2[%c0_1, %c0_2] : memref<32x128xbf16, #tpu.memory_space<vmem>>, vector<32x128xbf16>
    %cst = arith.constant dense<0.000000e+00> : vector<8x128xf32>
    %3 = tpu.matmul %1, %2, %cst {dimension_numbers = #tpu.dot_dimension_numbers<[1], [0], [0], [1], [0, 0, 1, 1], [], []>} : vector<8x32xbf16>, vector<32x128xbf16>, vector<8x128xf32> -> vector<8x128xf32>
    %c0_3 = arith.constant 0 : index
    %c0_4 = arith.constant 0 : index
    %4 = vector.load %arg3[%c0_3, %c0_4] : memref<1x128xf32, #tpu.memory_space<vmem>>, vector<1x128xf32>
    %5 = vector.broadcast %4 : vector<1x128xf32> to vector<8x128xf32>
    %6 = arith.addf %3, %5 : vector<8x128xf32>
    %cst_5 = arith.constant 0.000000e+00 : f32
    %7 = vector.broadcast %cst_5 : f32 to vector<8x128xf32>
    %8 = arith.maximumf %6, %7 : vector<8x128xf32>
    %9 = arith.truncf %8 : vector<8x128xf32> to vector<8x128xbf16>
    %c0_6 = arith.constant 0 : index
    %c0_7 = arith.constant 0 : index
    %10 = vector.load %arg4[%c0_6, %c0_7] : memref<128x128xbf16, #tpu.memory_space<vmem>>, vector<128x128xbf16>
    %cst_8 = arith.constant dense<0.000000e+00> : vector<8x128xf32>
    %11 = tpu.matmul %9, %10, %cst_8 {dimension_numbers = #tpu.dot_dimension_numbers<[1], [0], [0], [1], [0, 0, 1, 1], [], []>} : vector<8x128xbf16>, vector<128x128xbf16>, vector<8x128xf32> -> vector<8x128xf32>
    %c0_9 = arith.constant 0 : index
    %c0_10 = arith.constant 0 : index
    %12 = vector.load %arg5[%c0_9, %c0_10] : memref<1x128xf32, #tpu.memory_space<vmem>>, vector<1x128xf32>
    %13 = vector.broadcast %12 : vector<1x128xf32> to vector<8x128xf32>
    %14 = arith.addf %11, %13 : vector<8x128xf32>
    %cst_11 = arith.constant 0.000000e+00 : f32
    %15 = vector.broadcast %cst_11 : f32 to vector<8x128xf32>
    %16 = arith.maximumf %14, %15 : vector<8x128xf32>
    %17 = arith.truncf %16 : vector<8x128xf32> to vector<8x128xbf16>
    %c0_12 = arith.constant 0 : index
    %c0_13 = arith.constant 0 : index
    %18 = vector.load %arg6[%c0_12, %c0_13] : memref<128x256xbf16, #tpu.memory_space<vmem>>, vector<128x256xbf16>
    %cst_14 = arith.constant dense<0.000000e+00> : vector<8x256xf32>
    %19 = tpu.matmul %17, %18, %cst_14 {dimension_numbers = #tpu.dot_dimension_numbers<[1], [0], [0], [1], [0, 0, 1, 1], [], []>} : vector<8x128xbf16>, vector<128x256xbf16>, vector<8x256xf32> -> vector<8x256xf32>
    %c0_15 = arith.constant 0 : index
    %c0_16 = arith.constant 0 : index
    %20 = vector.load %arg7[%c0_15, %c0_16] : memref<1x256xf32, #tpu.memory_space<vmem>>, vector<1x256xf32>
    %21 = vector.broadcast %20 : vector<1x256xf32> to vector<8x256xf32>
    %22 = arith.addf %19, %21 : vector<8x256xf32>
    %cst_17 = arith.constant 0.000000e+00 : f32
    %23 = vector.broadcast %cst_17 : f32 to vector<8x256xf32>
    %24 = arith.maximumf %22, %23 : vector<8x256xf32>
    %25 = arith.truncf %24 : vector<8x256xf32> to vector<8x256xbf16>
    %c0_18 = arith.constant 0 : index
    %c0_19 = arith.constant 0 : index
    %26 = vector.load %arg8[%c0_18, %c0_19] : memref<256x512xbf16, #tpu.memory_space<vmem>>, vector<256x512xbf16>
    %cst_20 = arith.constant dense<0.000000e+00> : vector<8x512xf32>
    %27 = tpu.matmul %25, %26, %cst_20 {dimension_numbers = #tpu.dot_dimension_numbers<[1], [0], [0], [1], [0, 0, 1, 1], [], []>} : vector<8x256xbf16>, vector<256x512xbf16>, vector<8x512xf32> -> vector<8x512xf32>
    %c0_21 = arith.constant 0 : index
    %c0_22 = arith.constant 0 : index
    %28 = vector.load %arg9[%c0_21, %c0_22] : memref<1x512xf32, #tpu.memory_space<vmem>>, vector<1x512xf32>
    %29 = vector.broadcast %28 : vector<1x512xf32> to vector<8x512xf32>
    %30 = arith.addf %27, %29 : vector<8x512xf32>
    %cst_23 = arith.constant 0.000000e+00 : f32
    %31 = vector.broadcast %cst_23 : f32 to vector<8x512xf32>
    %32 = arith.maximumf %30, %31 : vector<8x512xf32>
    %33 = arith.truncf %32 : vector<8x512xf32> to vector<8x512xbf16>
    %c0_24 = arith.constant 0 : index
    %c0_25 = arith.constant 0 : index
    %34 = vector.load %arg10[%c0_24, %c0_25] : memref<512x896xbf16, #tpu.memory_space<vmem>>, vector<512x896xbf16>
    %cst_26 = arith.constant dense<0.000000e+00> : vector<8x896xf32>
    %35 = tpu.matmul %33, %34, %cst_26 {dimension_numbers = #tpu.dot_dimension_numbers<[1], [0], [0], [1], [0, 0, 1, 1], [], []>} : vector<8x512xbf16>, vector<512x896xbf16>, vector<8x896xf32> -> vector<8x896xf32>
    %c0_27 = arith.constant 0 : index
    %c0_28 = arith.constant 0 : index
    %36 = vector.load %arg11[%c0_27, %c0_28] : memref<1x896xf32, #tpu.memory_space<vmem>>, vector<1x896xf32>
    %37 = vector.broadcast %36 : vector<1x896xf32> to vector<8x896xf32>
    %38 = arith.addf %35, %37 : vector<8x896xf32>
    %39 = math.tanh %38 : vector<8x896xf32>
    %c0_29 = arith.constant 0 : index
    %c0_30 = arith.constant 0 : index
    %40 = vector.load %arg12[%c0_29, %c0_30] : memref<8x896xf32, #tpu.memory_space<vmem>>, vector<8x896xf32>
    tpu.vector_store %arg12[%c0_29, %c0_30], %39 {strides = array<i32>} : memref<8x896xf32, #tpu.memory_space<vmem>>, vector<8x896xf32>,
    return
  }
  func.func @transform_0(%arg0: i32) -> (i32, i32) {
    %c0_i32 = arith.constant 0 : i32
    %c0_i32_0 = arith.constant 0 : i32
    return %arg0, %c0_i32 : i32, i32
  }
  func.func @transform_1(%arg0: i32) -> (i32, i32) {
    %c0_i32 = arith.constant 0 : i32
    %c0_i32_0 = arith.constant 0 : i32
    %c0_i32_1 = arith.constant 0 : i32
    return %c0_i32, %c0_i32_0 : i32, i32
  }
  func.func @transform_2(%arg0: i32) -> (i32, i32) {
    %c0_i32 = arith.constant 0 : i32
    %c0_i32_0 = arith.constant 0 : i32
    %c0_i32_1 = arith.constant 0 : i32
    return %c0_i32, %c0_i32_0 : i32, i32
  }
  func.func @transform_3(%arg0: i32) -> (i32, i32) {
    %c0_i32 = arith.constant 0 : i32
    %c0_i32_0 = arith.constant 0 : i32
    %c0_i32_1 = arith.constant 0 : i32
    return %c0_i32, %c0_i32_0 : i32, i32
  }
  func.func @transform_4(%arg0: i32) -> (i32, i32) {
    %c0_i32 = arith.constant 0 : i32
    %c0_i32_0 = arith.constant 0 : i32
    %c0_i32_1 = arith.constant 0 : i32
    return %c0_i32, %c0_i32_0 : i32, i32
  }
  func.func @transform_5(%arg0: i32) -> (i32, i32) {
    %c0_i32 = arith.constant 0 : i32
    %c0_i32_0 = arith.constant 0 : i32
    %c0_i32_1 = arith.constant 0 : i32
    return %c0_i32, %c0_i32_0 : i32, i32
  }
  func.func @transform_6(%arg0: i32) -> (i32, i32) {
    %c0_i32 = arith.constant 0 : i32
    %c0_i32_0 = arith.constant 0 : i32
    %c0_i32_1 = arith.constant 0 : i32
    return %c0_i32, %c0_i32_0 : i32, i32
  }
  func.func @transform_7(%arg0: i32) -> (i32, i32) {
    %c0_i32 = arith.constant 0 : i32
    %c0_i32_0 = arith.constant 0 : i32
    %c0_i32_1 = arith.constant 0 : i32
    return %c0_i32, %c0_i32_0 : i32, i32
  }
  func.func @transform_8(%arg0: i32) -> (i32, i32) {
    %c0_i32 = arith.constant 0 : i32
    %c0_i32_0 = arith.constant 0 : i32
    %c0_i32_1 = arith.constant 0 : i32
    return %c0_i32, %c0_i32_0 : i32, i32
  }
  func.func @transform_9(%arg0: i32) -> (i32, i32) {
    %c0_i32 = arith.constant 0 : i32
    %c0_i32_0 = arith.constant 0 : i32
    %c0_i32_1 = arith.constant 0 : i32
    return %c0_i32, %c0_i32_0 : i32, i32
  }
  func.func @transform_10(%arg0: i32) -> (i32, i32) {
    %c0_i32 = arith.constant 0 : i32
    %c0_i32_0 = arith.constant 0 : i32
    %c0_i32_1 = arith.constant 0 : i32
    return %c0_i32, %c0_i32_0 : i32, i32
  }
  func.func @transform_11(%arg0: i32) -> (i32, i32) {
    %c0_i32 = arith.constant 0 : i32
    %c0_i32_0 = arith.constant 0 : i32
    return %arg0, %c0_i32 : i32, i32
  }
}

</mosaic_0001>

<llo_original>
// kernel: tpu_custom_call.1
$region0: #{tpu_custom_call.1}
  #allocation0 [shape = 'u32[]', space=smem, size = 0x4, offset = 0x4, fixed_abs, tag = 'smem constant byte address 0x4 - core index']
  #allocation1 [shape = 'u32[144,128]{1,0:T(1,128)}', space=vmem, size = 0x12000, scoped, tag = 'internal scratch']
  %s0 = inlined_call_operand.hbm [shape: f32[8,32], index: 0, kind: input, shape index: {}]
  %s1 = inlined_call_operand.hbm [shape: bf16[32,128], index: 1, kind: input, shape index: {}]
  %s2 = inlined_call_operand.vmem [shape: f32[1,128], index: 2, kind: input, shape index: {}]
  %s3 = inlined_call_operand.hbm [shape: bf16[128,128], index: 3, kind: input, shape index: {}]
  %s4 = inlined_call_operand.vmem [shape: f32[1,128], index: 4, kind: input, shape index: {}]
  %s5 = inlined_call_operand.hbm [shape: bf16[128,256], index: 5, kind: input, shape index: {}]
  %s6 = inlined_call_operand.vmem [shape: f32[1,256], index: 6, kind: input, shape index: {}]
  %s7 = inlined_call_operand.hbm [shape: bf16[256,512], index: 7, kind: input, shape index: {}]
  %s8 = inlined_call_operand.vmem [shape: f32[1,512], index: 8, kind: input, shape index: {}]
  %s9 = inlined_call_operand.hbm [shape: bf16[512,896], index: 9, kind: input, shape index: {}]
  %s10 = inlined_call_operand.vmem [shape: f32[1,896], index: 10, kind: input, shape index: {}]
  %s11 = inlined_call_operand.hbm [shape: f32[8,896], index: 11, kind: output, shape index: {}]
  %s12 = sld [smem:[#allocation0]]
  $region78: #{tpu_custom_call.1} parent=0
    _
  %s14 = ssub.s32 1, %s12
  %s15 = scalar_select 0, %s14, %s12
  $region1: #{tpu_custom_call.1} parent=0
    #allocation2 [shape = 'u8[4096]{0}', space=vmem, size = 0x1000, scoped, tag = 'input window, operand 0, single buffered']
    #allocation3 [shape = 's32[1]{0}', space=sflag, size = 0x4, scoped, tag = 'scoped memory for tpu_custom_call.1']
    #allocation4 [shape = 's32[1]{0}', space=sflag, size = 0x4, scoped, tag = 'scoped memory for tpu_custom_call.1']
    #allocation5 [shape = 'u8[8192]{0}', space=vmem, size = 0x2000, scoped, tag = 'input window, operand 1, single buffered']
    #allocation6 [shape = 's32[1]{0}', space=sflag, size = 0x4, scoped, tag = 'scoped memory for tpu_custom_call.1']
    #allocation7 [shape = 'u8[32768]{0}', space=vmem, size = 0x8000, scoped, tag = 'input window, operand 3, single buffered']
    #allocation8 [shape = 'u8[65536]{0}', space=vmem, size = 0x10000, scoped, tag = 'input window, operand 5, single buffered']
    #allocation9 [shape = 's32[1]{0}', space=sflag, size = 0x4, scoped, tag = 'scoped memory for tpu_custom_call.1']
    #allocation10 [shape = 'u8[262144]{0}', space=vmem, size = 0x40000, scoped, tag = 'input window, operand 7, single buffered']
    #allocation11 [shape = 'u8[917504]{0}', space=vmem, size = 0xe0000, scoped, tag = 'input window, operand 9, single buffered']
    #allocation12 [shape = 's32[1]{0}', space=sflag, size = 0x4, scoped, tag = 'scoped memory for tpu_custom_call.1']
    #allocation13 [shape = 'u8[28672]{0}', space=vmem, size = 0x7000, scoped, tag = 'output window, operand 0, single buffered']
    %16 = vsyncpa [#allocation3], 0
    %17 = vsyncpa [#allocation6], 0
    %18 = vsyncpa [#allocation9], 0
    %19 = vsyncpa [#allocation12], 0
    %20 = vsyncpa [#allocation4], 0
    // Predicated region
    $region2: #{tpu_custom_call.1} parent=1 // pred_check
      _
    $region3: #{tpu_custom_call.1} parent=1 // pred_check_branch
      %22 = sbr.rel (0) target = $region5
    $region4: #{tpu_custom_call.1} parent=1 // pred_region
      %s24 = ssub.s32 128, 128
      %25 = vsyncadd [#allocation3], %s24
      %s27 = sshll.u32 [#allocation2], 4
      %s28 = int_to_ptr.vmem [resolvable:$true] %s27
      %30 = dma.hbm_to_vmem [thread:$0]  %s0, 128, %s28, [#allocation3]
    $region5: #{tpu_custom_call.1} parent=1 // pred_fallthru
      _
    // Predicated region
    $region6: #{tpu_custom_call.1} parent=1 // pred_check
      _
    $region7: #{tpu_custom_call.1} parent=1 // pred_check_branch
      %32 = sbr.rel (0) target = $region9
    $region8: #{tpu_custom_call.1} parent=1 // pred_region
      %s34 = ssub.s32 256, 256
      %35 = vsyncadd [#allocation6], %s34
      %s36 = sshll.u32 [#allocation5], 4
      %s37 = int_to_ptr.vmem [resolvable:$true] %s36
      %42 = dma.hbm_to_vmem [thread:$0]  %s1, 256, %s37, [#allocation6], 64, 64, 4
    $region9: #{tpu_custom_call.1} parent=1 // pred_fallthru
      _
    // Predicated region
    $region10: #{tpu_custom_call.1} parent=1 // pred_check
      _
    $region11: #{tpu_custom_call.1} parent=1 // pred_check_branch
      %44 = sbr.rel (0) target = $region13
    $region12: #{tpu_custom_call.1} parent=1 // pred_region
      _
    $region13: #{tpu_custom_call.1} parent=1 // pred_fallthru
      _
    // Predicated region
    $region14: #{tpu_custom_call.1} parent=1 // pred_check
      _
    $region15: #{tpu_custom_call.1} parent=1 // pred_check_branch
      %46 = sbr.rel (0) target = $region17
    $region16: #{tpu_custom_call.1} parent=1 // pred_region
      %s48 = ssub.s32 1024, 1024
      %49 = vsyncadd [#allocation6], %s48
      %s50 = sshll.u32 [#allocation7], 4
      %s51 = int_to_ptr.vmem [resolvable:$true] %s50
      %56 = dma.hbm_to_vmem [thread:$0]  %s3, 1024, %s51, [#allocation6], 64, 64, 4
    $region17: #{tpu_custom_call.1} parent=1 // pred_fallthru
      _
    // Predicated region
    $region18: #{tpu_custom_call.1} parent=1 // pred_check
      _
    $region19: #{tpu_custom_call.1} parent=1 // pred_check_branch
      %58 = sbr.rel (0) target = $region21
    $region20: #{tpu_custom_call.1} parent=1 // pred_region
      _
    $region21: #{tpu_custom_call.1} parent=1 // pred_fallthru
      _
    // Predicated region
    $region22: #{tpu_custom_call.1} parent=1 // pred_check
      _
    $region23: #{tpu_custom_call.1} parent=1 // pred_check_branch
      %60 = sbr.rel (0) target = $region25
    $region24: #{tpu_custom_call.1} parent=1 // pred_region
      %s62 = ssub.s32 2048, 2048
      %63 = vsyncadd [#allocation9], %s62
      %s64 = sshll.u32 [#allocation8], 4
      %s65 = int_to_ptr.vmem [resolvable:$true] %s64
      %70 = dma.hbm_to_vmem [thread:$0]  %s5, 2048, %s65, [#allocation9], 128, 128, 8
    $region25: #{tpu_custom_call.1} parent=1 // pred_fallthru
      _
    // Predicated region
    $region26: #{tpu_custom_call.1} parent=1 // pred_check
      _
    $region27: #{tpu_custom_call.1} parent=1 // pred_check_branch
      %72 = sbr.rel (0) target = $region29
    $region28: #{tpu_custom_call.1} parent=1 // pred_region
      _
    $region29: #{tpu_custom_call.1} parent=1 // pred_fallthru
      _
    // Predicated region
    $region30: #{tpu_custom_call.1} parent=1 // pred_check
      _
    $region31: #{tpu_custom_call.1} parent=1 // pred_check_branch
      %74 = sbr.rel (0) target = $region33
    $region32: #{tpu_custom_call.1} parent=1 // pred_region
      %s76 = ssub.s32 8192, 8192
      %77 = vsyncadd [#allocation9], %s76
      %s78 = sshll.u32 [#allocation10], 4
      %s79 = int_to_ptr.vmem [resolvable:$true] %s78
      %84 = dma.hbm_to_vmem [thread:$0]  %s7, 8192, %s79, [#allocation9], 256, 256, 16
    $region33: #{tpu_custom_call.1} parent=1 // pred_fallthru
      _
    // Predicated region
    $region34: #{tpu_custom_call.1} parent=1 // pred_check
      _
    $region35: #{tpu_custom_call.1} parent=1 // pred_check_branch
      %86 = sbr.rel (0) target = $region37
    $region36: #{tpu_custom_call.1} parent=1 // pred_region
      _
    $region37: #{tpu_custom_call.1} parent=1 // pred_fallthru
      _
    // Predicated region
    $region38: #{tpu_custom_call.1} parent=1 // pred_check
      _
    $region39: #{tpu_custom_call.1} parent=1 // pred_check_branch
      %88 = sbr.rel (0) target = $region41
    $region40: #{tpu_custom_call.1} parent=1 // pred_region
      %s90 = ssub.s32 28672, 28672
      %91 = vsyncadd [#allocation12], %s90
      %s92 = sshll.u32 [#allocation11], 4
      %s93 = int_to_ptr.vmem [resolvable:$true] %s92
      %98 = dma.hbm_to_vmem [thread:$0]  %s9, 28672, %s93, [#allocation12], 448, 448, 28
    $region41: #{tpu_custom_call.1} parent=1 // pred_fallthru
      _
    // Predicated region
    $region42: #{tpu_custom_call.1} parent=1 // pred_check
      _
    $region43: #{tpu_custom_call.1} parent=1 // pred_check_branch
      %100 = sbr.rel (0) target = $region45
    $region44: #{tpu_custom_call.1} parent=1 // pred_region
      _
    $region45: #{tpu_custom_call.1} parent=1 // pred_fallthru
      _
    // Predicated region
    $region46: #{tpu_custom_call.1} parent=1 // pred_check
      _
    $region47: #{tpu_custom_call.1} parent=1 // pred_check_branch
      %102 = sbr.rel (0) target = $region49
    $region48: #{tpu_custom_call.1} parent=1 // pred_region
      %103 = dma.done [#allocation3], 128
    $region49: #{tpu_custom_call.1} parent=1 // pred_fallthru
      _
    // Predicated region
    $region50: #{tpu_custom_call.1} parent=1 // pred_check
      _
    $region51: #{tpu_custom_call.1} parent=1 // pred_check_branch
      %105 = sbr.rel (0) target = $region53
    $region52: #{tpu_custom_call.1} parent=1 // pred_region
      %106 = dma.done [#allocation6], 256
    $region53: #{tpu_custom_call.1} parent=1 // pred_fallthru
      _
    // Predicated region
    $region54: #{tpu_custom_call.1} parent=1 // pred_check
      _
    $region55: #{tpu_custom_call.1} parent=1 // pred_check_branch
      %108 = sbr.rel (0) target = $region57
    $region56: #{tpu_custom_call.1} parent=1 // pred_region
      %109 = dma.done [#allocation6], 1024
    $region57: #{tpu_custom_call.1} parent=1 // pred_fallthru
      _
    // Predicated region
    $region58: #{tpu_custom_call.1} parent=1 // pred_check
      _
    $region59: #{tpu_custom_call.1} parent=1 // pred_check_branch
      %111 = sbr.rel (0) target = $region61
    $region60: #{tpu_custom_call.1} parent=1 // pred_region
      %112 = dma.done [#allocation9], 2048
    $region61: #{tpu_custom_call.1} parent=1 // pred_fallthru
      _
    // Predicated region
    $region62: #{tpu_custom_call.1} parent=1 // pred_check
      _
    $region63: #{tpu_custom_call.1} parent=1 // pred_check_branch
      %114 = sbr.rel (0) target = $region65
    $region64: #{tpu_custom_call.1} parent=1 // pred_region
      %115 = dma.done [#allocation9], 8192
    $region65: #{tpu_custom_call.1} parent=1 // pred_fallthru
      _
    // Predicated region
    $region66: #{tpu_custom_call.1} parent=1 // pred_check
      _
    $region67: #{tpu_custom_call.1} parent=1 // pred_check_branch
      %117 = sbr.rel (0) target = $region69
    $region68: #{tpu_custom_call.1} parent=1 // pred_region
      %118 = dma.done [#allocation12], 28672
    $region69: #{tpu_custom_call.1} parent=1 // pred_fallthru
      _
    %v120 = vld [vmem:[#allocation2] sm:$0xff]
    %v121 = vpack.c.bf16 %v120, %v120
    %v122 = vld [vmem:[#allocation5] sm:$0xf]
    %v123 = vld [vmem:[#allocation5 + $0x4] sm:$0xf]
    %v124 = vld [vmem:[#allocation5 + $0x8] sm:$0xf]
    %v125 = vld [vmem:[#allocation5 + $0xc] sm:$0xf]
    %v126 = vld [vmem:[%s2] sm:$0x1]
    %v128 = vlaneseq
    %v129 = vshrl.u32 %v128, 7
    %v130 = vsub.s32 0, %v129
    %v131 = vrot.slane %v126, %v130
    %v137 = vunpack.c.l.b16 %v122
    %v138 = vunpack.c.l.b16 %v123
    %v139 = vunpack.c.l.b16 %v124
    %v140 = vunpack.c.l.b16 %v125
    %v141 = vpack.c.b16 %v138, %v137
    %v142 = vpack.c.b16 %v140, %v139
    %vm145 = vcmask 261120
    %v147 = vsel %vm145, %v121, 0
    %149 = vmatprep.subr.bf16.mxu0 0
    %150 = vmatpush1.bf16.msra.mxu0 %v141
    %151 = vmatprep.subr.bf16.mxu0 0
    %152 = vmatpush1.bf16.msra.mxu0 %v142
    %153 = vmatprep.subr.bf16.mxu0 0
    %154 = vmatpush1.bf16.msra.mxu0 0
    %155 = vmatprep.subr.bf16.mxu0 0
    %156 = vmatpush1.bf16.msra.mxu0 0
    %157 = vmatprep.subr.bf16.mxu0 0
    %158 = vmatpush1.bf16.msra.mxu0 0
    %159 = vmatprep.subr.bf16.mxu0 0
    %160 = vmatpush1.bf16.msra.mxu0 0
    %161 = vmatprep.subr.bf16.mxu0 0
    %162 = vmatpush1.bf16.msra.mxu0 0
    %163 = vmatprep.subr.bf16.mxu0 0
    %164 = vmatpush1.bf16.msra.mxu0 0
    %165 = vmatprep.subr.bf16.mxu0 0
    %166 = vmatpush1.bf16.msra.mxu0 0
    %167 = vmatprep.subr.bf16.mxu0 0
    %168 = vmatpush1.bf16.msra.mxu0 0
    %169 = vmatprep.subr.bf16.mxu0 0
    %170 = vmatpush1.bf16.msra.mxu0 0
    %171 = vmatprep.subr.bf16.mxu0 0
    %172 = vmatpush1.bf16.msra.mxu0 0
    %173 = vmatprep.subr.bf16.mxu0 0
    %174 = vmatpush1.bf16.msra.mxu0 0
    %175 = vmatprep.subr.bf16.mxu0 0
    %176 = vmatpush1.bf16.msra.mxu0 0
    %177 = vmatprep.subr.bf16.mxu0 0
    %178 = vmatpush1.bf16.msra.mxu0 0
    %179 = vmatprep.subr.bf16.mxu0 0
    %180 = vmatpush1.bf16.msra.mxu0 0
    %181 = vmatprep.mubr.bf16.mxu0 0
    %182 = vmatmul.mubr.bf16.gmra.mrb[0].mxu0 %v147
    %v183 = vpop.f32.mrb[0].mxu0
    %v184 = vadd.f32 %v131, %v183
    %v185 = vpop.f32.mrb[0].mxu0
    %v186 = vpop.f32.mrb[0].mxu0
    %v187 = vpop.f32.mrb[0].mxu0
    %188 = vdwg.mxu0
    %v189 = vmax.f32 %v184, 0.0
    %v190 = vpack.c.bf16 %v189, %v189
    %v191 = vld [vmem:[#allocation7] sm:$0xf]
    %v192 = vld [vmem:[#allocation7 + $0x4] sm:$0xf]
    %v193 = vld [vmem:[#allocation7 + $0x8] sm:$0xf]
    %v194 = vld [vmem:[#allocation7 + $0xc] sm:$0xf]
    %v195 = vld [vmem:[#allocation7 + $0x10] sm:$0xf]
    %v196 = vld [vmem:[#allocation7 + $0x14] sm:$0xf]
    %v197 = vld [vmem:[#allocation7 + $0x18] sm:$0xf]
    %v198 = vld [vmem:[#allocation7 + $0x1c] sm:$0xf]
    %v199 = vld [vmem:[#allocation7 + $0x20] sm:$0xf]
    %v200 = vld [vmem:[#allocation7 + $0x24] sm:$0xf]
    %v201 = vld [vmem:[#allocation7 + $0x28] sm:$0xf]
    %v202 = vld [vmem:[#allocation7 + $0x2c] sm:$0xf]
    %v203 = vld [vmem:[#allocation7 + $0x30] sm:$0xf]
    %v204 = vld [vmem:[#allocation7 + $0x34] sm:$0xf]
    %v205 = vld [vmem:[#allocation7 + $0x38] sm:$0xf]
    %v206 = vld [vmem:[#allocation7 + $0x3c] sm:$0xf]
    %v207 = vld [vmem:[%s4] sm:$0x1]
    %v209 = vlaneseq
    %v210 = vshrl.u32 %v209, 7
    %v211 = vsub.s32 0, %v210
    %v212 = vrot.slane %v207, %v211
    %v230 = vunpack.c.l.b16 %v191
    %v231 = vunpack.c.l.b16 %v192
    %v232 = vunpack.c.l.b16 %v193
    %v233 = vunpack.c.l.b16 %v194
    %v234 = vunpack.c.l.b16 %v195
    %v235 = vunpack.c.l.b16 %v196
    %v236 = vunpack.c.l.b16 %v197
    %v237 = vunpack.c.l.b16 %v198
    %v238 = vunpack.c.l.b16 %v199
    %v239 = vunpack.c.l.b16 %v200
    %v240 = vunpack.c.l.b16 %v201
    %v241 = vunpack.c.l.b16 %v202
    %v242 = vunpack.c.l.b16 %v203
    %v243 = vunpack.c.l.b16 %v204
    %v244 = vunpack.c.l.b16 %v205
    %v245 = vunpack.c.l.b16 %v206
    %v246 = vpack.c.b16 %v231, %v230
    %v247 = vpack.c.b16 %v233, %v232
    %v248 = vpack.c.b16 %v235, %v234
    %v249 = vpack.c.b16 %v237, %v236
    %v250 = vpack.c.b16 %v239, %v238
    %v251 = vpack.c.b16 %v241, %v240
    %v252 = vpack.c.b16 %v243, %v242
    %v253 = vpack.c.b16 %v245, %v244
    %262 = vmatprep.subr.bf16.mxu0 0
    %263 = vmatpush1.bf16.msra.mxu0 %v246
    %264 = vmatprep.subr.bf16.mxu0 0
    %265 = vmatpush1.bf16.msra.mxu0 %v247
    %266 = vmatprep.subr.bf16.mxu0 0
    %267 = vmatpush1.bf16.msra.mxu0 %v248
    %268 = vmatprep.subr.bf16.mxu0 0
    %269 = vmatpush1.bf16.msra.mxu0 %v249
    %270 = vmatprep.subr.bf16.mxu0 0
    %271 = vmatpush1.bf16.msra.mxu0 %v250
    %272 = vmatprep.subr.bf16.mxu0 0
    %273 = vmatpush1.bf16.msra.mxu0 %v251
    %274 = vmatprep.subr.bf16.mxu0 0
    %275 = vmatpush1.bf16.msra.mxu0 %v252
    %276 = vmatprep.subr.bf16.mxu0 0
    %277 = vmatpush1.bf16.msra.mxu0 %v253
    %278 = vmatprep.subr.bf16.mxu0 0
    %279 = vmatpush1.bf16.msra.mxu0 0
    %280 = vmatprep.subr.bf16.mxu0 0
    %281 = vmatpush1.bf16.msra.mxu0 0
    %282 = vmatprep.subr.bf16.mxu0 0
    %283 = vmatpush1.bf16.msra.mxu0 0
    %284 = vmatprep.subr.bf16.mxu0 0
    %285 = vmatpush1.bf16.msra.mxu0 0
    %286 = vmatprep.subr.bf16.mxu0 0
    %287 = vmatpush1.bf16.msra.mxu0 0
    %288 = vmatprep.subr.bf16.mxu0 0
    %289 = vmatpush1.bf16.msra.mxu0 0
    %290 = vmatprep.subr.bf16.mxu0 0
    %291 = vmatpush1.bf16.msra.mxu0 0
    %292 = vmatprep.subr.bf16.mxu0 0
    %293 = vmatpush1.bf16.msra.mxu0 0
    %294 = vmatprep.mubr.bf16.mxu0 0
    %295 = vmatmul.mubr.bf16.gmra.mrb[0].mxu0 %v190
    %v296 = vpop.f32.mrb[0].mxu0
    %v297 = vadd.f32 %v212, %v296
    %v298 = vpop.f32.mrb[0].mxu0
    %v299 = vpop.f32.mrb[0].mxu0
    %v300 = vpop.f32.mrb[0].mxu0
    %301 = vdwg.mxu0
    %v302 = vmax.f32 %v297, 0.0
    %v303 = vpack.c.bf16 %v302, %v302
    %v304 = vld [vmem:[#allocation8] sm:$0xff]
    %v305 = vld [vmem:[#allocation8 + $0x8] sm:$0xff]
    %v306 = vld [vmem:[#allocation8 + $0x10] sm:$0xff]
    %v307 = vld [vmem:[#allocation8 + $0x18] sm:$0xff]
    %v308 = vld [vmem:[#allocation8 + $0x20] sm:$0xff]
    %v309 = vld [vmem:[#allocation8 + $0x28] sm:$0xff]
    %v310 = vld [vmem:[#allocation8 + $0x30] sm:$0xff]
    %v311 = vld [vmem:[#allocation8 + $0x38] sm:$0xff]
    %v312 = vld [vmem:[#allocation8 + $0x40] sm:$0xff]
    %v313 = vld [vmem:[#allocation8 + $0x48] sm:$0xff]
    %v314 = vld [vmem:[#allocation8 + $0x50] sm:$0xff]
    %v315 = vld [vmem:[#allocation8 + $0x58] sm:$0xff]
    %v316 = vld [vmem:[#allocation8 + $0x60] sm:$0xff]
    %v317 = vld [vmem:[#allocation8 + $0x68] sm:$0xff]
    %v318 = vld [vmem:[#allocation8 + $0x70] sm:$0xff]
    %v319 = vld [vmem:[#allocation8 + $0x78] sm:$0xff]
    %v320 = vld [vmem:[%s6] sm:$0x3]
    %v322 = vlaneseq
    %v323 = vshrl.u32 %v322, 7
    %v324 = vsub.s32 0, %v323
    %v325 = vrot.slane %v320, %v324
    %v326 = vlaneseq
    %v327 = vshrl.u32 %v326, 7
    %v328 = vsub.s32 1, %v327
    %v329 = vrot.slane %v320, %v328
    %v348 = vunpack.c.l.b16 %v304
    %v349 = vunpack.c.h.b16 %v304
    %v350 = vunpack.c.l.b16 %v305
    %v351 = vunpack.c.h.b16 %v305
    %v352 = vunpack.c.l.b16 %v306
    %v353 = vunpack.c.h.b16 %v306
    %v354 = vunpack.c.l.b16 %v307
    %v355 = vunpack.c.h.b16 %v307
    %v356 = vunpack.c.l.b16 %v308
    %v357 = vunpack.c.h.b16 %v308
    %v358 = vunpack.c.l.b16 %v309
    %v359 = vunpack.c.h.b16 %v309
    %v360 = vunpack.c.l.b16 %v310
    %v361 = vunpack.c.h.b16 %v310
    %v362 = vunpack.c.l.b16 %v311
    %v363 = vunpack.c.h.b16 %v311
    %v364 = vunpack.c.l.b16 %v312
    %v365 = vunpack.c.h.b16 %v312
    %v366 = vunpack.c.l.b16 %v313
    %v367 = vunpack.c.h.b16 %v313
    %v368 = vunpack.c.l.b16 %v314
    %v369 = vunpack.c.h.b16 %v314
    %v370 = vunpack.c.l.b16 %v315
    %v371 = vunpack.c.h.b16 %v315
    %v372 = vunpack.c.l.b16 %v316
    %v373 = vunpack.c.h.b16 %v316
    %v374 = vunpack.c.l.b16 %v317
    %v375 = vunpack.c.h.b16 %v317
    %v376 = vunpack.c.l.b16 %v318
    %v377 = vunpack.c.h.b16 %v318
    %v378 = vunpack.c.l.b16 %v319
    %v379 = vunpack.c.h.b16 %v319
    %v380 = vpack.c.b16 %v350, %v348
    %v381 = vpack.c.b16 %v351, %v349
    %v382 = vpack.c.b16 %v354, %v352
    %v383 = vpack.c.b16 %v355, %v353
    %v384 = vpack.c.b16 %v358, %v356
    %v385 = vpack.c.b16 %v359, %v357
    %v386 = vpack.c.b16 %v362, %v360
    %v387 = vpack.c.b16 %v363, %v361
    %v388 = vpack.c.b16 %v366, %v364
    %v389 = vpack.c.b16 %v367, %v365
    %v390 = vpack.c.b16 %v370, %v368
    %v391 = vpack.c.b16 %v371, %v369
    %v392 = vpack.c.b16 %v374, %v372
    %v393 = vpack.c.b16 %v375, %v373
    %v394 = vpack.c.b16 %v378, %v376
    %v395 = vpack.c.b16 %v379, %v377
    %412 = vmatprep.subr.bf16.mxu0 %v381
    %413 = vmatpush1.bf16.msra.mxu0 %v380
    %414 = vmatprep.subr.bf16.mxu0 %v383
    %415 = vmatpush1.bf16.msra.mxu0 %v382
    %416 = vmatprep.subr.bf16.mxu0 %v385
    %417 = vmatpush1.bf16.msra.mxu0 %v384
    %418 = vmatprep.subr.bf16.mxu0 %v387
    %419 = vmatpush1.bf16.msra.mxu0 %v386
    %420 = vmatprep.subr.bf16.mxu0 %v389
    %421 = vmatpush1.bf16.msra.mxu0 %v388
    %422 = vmatprep.subr.bf16.mxu0 %v391
    %423 = vmatpush1.bf16.msra.mxu0 %v390
    %424 = vmatprep.subr.bf16.mxu0 %v393
    %425 = vmatpush1.bf16.msra.mxu0 %v392
    %426 = vmatprep.subr.bf16.mxu0 %v395
    %427 = vmatpush1.bf16.msra.mxu0 %v394
    %428 = vmatprep.subr.bf16.mxu0 0
    %429 = vmatpush1.bf16.msra.mxu0 0
    %430 = vmatprep.subr.bf16.mxu0 0
    %431 = vmatpush1.bf16.msra.mxu0 0
    %432 = vmatprep.subr.bf16.mxu0 0
    %433 = vmatpush1.bf16.msra.mxu0 0
    %434 = vmatprep.subr.bf16.mxu0 0
    %435 = vmatpush1.bf16.msra.mxu0 0
    %436 = vmatprep.subr.bf16.mxu0 0
    %437 = vmatpush1.bf16.msra.mxu0 0
    %438 = vmatprep.subr.bf16.mxu0 0
    %439 = vmatpush1.bf16.msra.mxu0 0
    %440 = vmatprep.subr.bf16.mxu0 0
    %441 = vmatpush1.bf16.msra.mxu0 0
    %442 = vmatprep.subr.bf16.mxu0 0
    %443 = vmatpush1.bf16.msra.mxu0 0
    %444 = vmatprep.mubr.bf16.mxu0 0
    %445 = vmatmul.mubr.bf16.gmra.mrb[0].mxu0 %v303
    %v446 = vpop.f32.mrb[0].mxu0
    %v447 = vadd.f32 %v325, %v446
    %v448 = vpop.f32.mrb[0].mxu0
    %v449 = vadd.f32 %v329, %v448
    %v450 = vpop.f32.mrb[0].mxu0
    %v451 = vpop.f32.mrb[0].mxu0
    %452 = vdwg.mxu0
    %v453 = vmax.f32 %v447, 0.0
    %v454 = vmax.f32 %v449, 0.0
    %v455 = vpack.c.bf16 %v453, %v453
    %v456 = vpack.c.bf16 %v454, %v454
    %v457 = vld [vmem:[#allocation10] sm:$0xff]
    %v458 = vld [vmem:[#allocation10 + $0x8] sm:$0xff]
    %v459 = vld [vmem:[#allocation10 + $0x10] sm:$0xff]
    %v460 = vld [vmem:[#allocation10 + $0x18] sm:$0xff]
    %v461 = vld [vmem:[#allocation10 + $0x20] sm:$0xff]
    %v462 = vld [vmem:[#allocation10 + $0x28] sm:$0xff]
    %v463 = vld [vmem:[#allocation10 + $0x30] sm:$0xff]
    %v464 = vld [vmem:[#allocation10 + $0x38] sm:$0xff]
    %v465 = vld [vmem:[#allocation10 + $0x40] sm:$0xff]
    %v466 = vld [vmem:[#allocation10 + $0x48] sm:$0xff]
    %v467 = vld [vmem:[#allocation10 + $0x50] sm:$0xff]
    %v468 = vld [vmem:[#allocation10 + $0x58] sm:$0xff]
    %v469 = vld [vmem:[#allocation10 + $0x60] sm:$0xff]
    %v470 = vld [vmem:[#allocation10 + $0x68] sm:$0xff]
    %v471 = vld [vmem:[#allocation10 + $0x70] sm:$0xff]
    %v472 = vld [vmem:[#allocation10 + $0x78] sm:$0xff]
    %v473 = vld [vmem:[#allocation10 + $0x80] sm:$0xff]
    %v474 = vld [vmem:[#allocation10 + $0x88] sm:$0xff]
    %v475 = vld [vmem:[#allocation10 + $0x90] sm:$0xff]
    %v476 = vld [vmem:[#allocation10 + $0x98] sm:$0xff]
    %v477 = vld [vmem:[#allocation10 + $0xa0] sm:$0xff]
    %v478 = vld [vmem:[#allocation10 + $0xa8] sm:$0xff]
    %v479 = vld [vmem:[#allocation10 + $0xb0] sm:$0xff]
    %v480 = vld [vmem:[#allocation10 + $0xb8] sm:$0xff]
    %v481 = vld [vmem:[#allocation10 + $0xc0] sm:$0xff]
    %v482 = vld [vmem:[#allocation10 + $0xc8] sm:$0xff]
    %v483 = vld [vmem:[#allocation10 + $0xd0] sm:$0xff]
    %v484 = vld [vmem:[#allocation10 + $0xd8] sm:$0xff]
    %v485 = vld [vmem:[#allocation10 + $0xe0] sm:$0xff]
    %v486 = vld [vmem:[#allocation10 + $0xe8] sm:$0xff]
    %v487 = vld [vmem:[#allocation10 + $0xf0] sm:$0xff]
    %v488 = vld [vmem:[#allocation10 + $0xf8] sm:$0xff]
    %v489 = vld [vmem:[#allocation10 + $0x100] sm:$0xff]
    %v490 = vld [vmem:[#allocation10 + $0x108] sm:$0xff]
    %v491 = vld [vmem:[#allocation10 + $0x110] sm:$0xff]
    %v492 = vld [vmem:[#allocation10 + $0x118] sm:$0xff]
    %v493 = vld [vmem:[#allocation10 + $0x120] sm:$0xff]
    %v494 = vld [vmem:[#allocation10 + $0x128] sm:$0xff]
    %v495 = vld [vmem:[#allocation10 + $0x130] sm:$0xff]
    %v496 = vld [vmem:[#allocation10 + $0x138] sm:$0xff]
    %v497 = vld [vmem:[#allocation10 + $0x140] sm:$0xff]
    %v498 = vld [vmem:[#allocation10 + $0x148] sm:$0xff]
    %v499 = vld [vmem:[#allocation10 + $0x150] sm:$0xff]
    %v500 = vld [vmem:[#allocation10 + $0x158] sm:$0xff]
    %v501 = vld [vmem:[#allocation10 + $0x160] sm:$0xff]
    %v502 = vld [vmem:[#allocation10 + $0x168] sm:$0xff]
    %v503 = vld [vmem:[#allocation10 + $0x170] sm:$0xff]
    %v504 = vld [vmem:[#allocation10 + $0x178] sm:$0xff]
    %v505 = vld [vmem:[#allocation10 + $0x180] sm:$0xff]
    %v506 = vld [vmem:[#allocation10 + $0x188] sm:$0xff]
    %v507 = vld [vmem:[#allocation10 + $0x190] sm:$0xff]
    %v508 = vld [vmem:[#allocation10 + $0x198] sm:$0xff]
    %v509 = vld [vmem:[#allocation10 + $0x1a0] sm:$0xff]
    %v510 = vld [vmem:[#allocation10 + $0x1a8] sm:$0xff]
    %v511 = vld [vmem:[#allocation10 + $0x1b0] sm:$0xff]
    %v512 = vld [vmem:[#allocation10 + $0x1b8] sm:$0xff]
    %v513 = vld [vmem:[#allocation10 + $0x1c0] sm:$0xff]
    %v514 = vld [vmem:[#allocation10 + $0x1c8] sm:$0xff]
    %v515 = vld [vmem:[#allocation10 + $0x1d0] sm:$0xff]
    %v516 = vld [vmem:[#allocation10 + $0x1d8] sm:$0xff]
    %v517 = vld [vmem:[#allocation10 + $0x1e0] sm:$0xff]
    %v518 = vld [vmem:[#allocation10 + $0x1e8] sm:$0xff]
    %v519 = vld [vmem:[#allocation10 + $0x1f0] sm:$0xff]
    %v520 = vld [vmem:[#allocation10 + $0x1f8] sm:$0xff]
    %v521 = vld [vmem:[%s8] sm:$0xf]
    %v523 = vlaneseq
    %v524 = vshrl.u32 %v523, 7
    %v525 = vsub.s32 0, %v524
    %v526 = vrot.slane %v521, %v525
    %v527 = vlaneseq
    %v528 = vshrl.u32 %v527, 7
    %v529 = vsub.s32 1, %v528
    %v530 = vrot.slane %v521, %v529
    %v531 = vlaneseq
    %v532 = vshrl.u32 %v531, 7
    %v533 = vsub.s32 2, %v532
    %v534 = vrot.slane %v521, %v533
    %v535 = vlaneseq
    %v536 = vshrl.u32 %v535, 7
    %v537 = vsub.s32 3, %v536
    %v538 = vrot.slane %v521, %v537
    %v607 = vunpack.c.l.b16 %v457
    %v608 = vunpack.c.h.b16 %v457
    %v609 = vunpack.c.l.b16 %v458
    %v610 = vunpack.c.h.b16 %v458
    %v611 = vunpack.c.l.b16 %v459
    %v612 = vunpack.c.h.b16 %v459
    %v613 = vunpack.c.l.b16 %v460
    %v614 = vunpack.c.h.b16 %v460
    %v615 = vunpack.c.l.b16 %v461
    %v616 = vunpack.c.h.b16 %v461
    %v617 = vunpack.c.l.b16 %v462
    %v618 = vunpack.c.h.b16 %v462
    %v619 = vunpack.c.l.b16 %v463
    %v620 = vunpack.c.h.b16 %v463
    %v621 = vunpack.c.l.b16 %v464
    %v622 = vunpack.c.h.b16 %v464
    %v623 = vunpack.c.l.b16 %v465
    %v624 = vunpack.c.h.b16 %v465
    %v625 = vunpack.c.l.b16 %v466
    %v626 = vunpack.c.h.b16 %v466
    %v627 = vunpack.c.l.b16 %v467
    %v628 = vunpack.c.h.b16 %v467
    %v629 = vunpack.c.l.b16 %v468
    %v630 = vunpack.c.h.b16 %v468
    %v631 = vunpack.c.l.b16 %v469
    %v632 = vunpack.c.h.b16 %v469
    %v633 = vunpack.c.l.b16 %v470
    %v634 = vunpack.c.h.b16 %v470
    %v635 = vunpack.c.l.b16 %v471
    %v636 = vunpack.c.h.b16 %v471
    %v637 = vunpack.c.l.b16 %v472
    %v638 = vunpack.c.h.b16 %v472
    %v639 = vunpack.c.l.b16 %v473
    %v640 = vunpack.c.h.b16 %v473
    %v641 = vunpack.c.l.b16 %v474
    %v642 = vunpack.c.h.b16 %v474
    %v643 = vunpack.c.l.b16 %v475
    %v644 = vunpack.c.h.b16 %v475
    %v645 = vunpack.c.l.b16 %v476
    %v646 = vunpack.c.h.b16 %v476
    %v647 = vunpack.c.l.b16 %v477
    %v648 = vunpack.c.h.b16 %v477
    %v649 = vunpack.c.l.b16 %v478
    %v650 = vunpack.c.h.b16 %v478
    %v651 = vunpack.c.l.b16 %v479
    %v652 = vunpack.c.h.b16 %v479
    %v653 = vunpack.c.l.b16 %v480
    %v654 = vunpack.c.h.b16 %v480
    %v655 = vunpack.c.l.b16 %v481
    %v656 = vunpack.c.h.b16 %v481
    %v657 = vunpack.c.l.b16 %v482
    %v658 = vunpack.c.h.b16 %v482
    %v659 = vunpack.c.l.b16 %v483
    %v660 = vunpack.c.h.b16 %v483
    %v661 = vunpack.c.l.b16 %v484
    %v662 = vunpack.c.h.b16 %v484
    %v663 = vunpack.c.l.b16 %v485
    %v664 = vunpack.c.h.b16 %v485
    %v665 = vunpack.c.l.b16 %v486
    %v666 = vunpack.c.h.b16 %v486
    %v667 = vunpack.c.l.b16 %v487
    %v668 = vunpack.c.h.b16 %v487
    %v669 = vunpack.c.l.b16 %v488
    %v670 = vunpack.c.h.b16 %v488
    %v671 = vunpack.c.l.b16 %v489
    %v672 = vunpack.c.h.b16 %v489
    %v673 = vunpack.c.l.b16 %v490
    %v674 = vunpack.c.h.b16 %v490
    %v675 = vunpack.c.l.b16 %v491
    %v676 = vunpack.c.h.b16 %v491
    %v677 = vunpack.c.l.b16 %v492
    %v678 = vunpack.c.h.b16 %v492
    %v679 = vunpack.c.l.b16 %v493
    %v680 = vunpack.c.h.b16 %v493
    %v681 = vunpack.c.l.b16 %v494
    %v682 = vunpack.c.h.b16 %v494
    %v683 = vunpack.c.l.b16 %v495
    %v684 = vunpack.c.h.b16 %v495
    %v685 = vunpack.c.l.b16 %v496
    %v686 = vunpack.c.h.b16 %v496
    %v687 = vunpack.c.l.b16 %v497
    %v688 = vunpack.c.h.b16 %v497
    %v689 = vunpack.c.l.b16 %v498
    %v690 = vunpack.c.h.b16 %v498
    %v691 = vunpack.c.l.b16 %v499
    %v692 = vunpack.c.h.b16 %v499
    %v693 = vunpack.c.l.b16 %v500
    %v694 = vunpack.c.h.b16 %v500
    %v695 = vunpack.c.l.b16 %v501
    %v696 = vunpack.c.h.b16 %v501
    %v697 = vunpack.c.l.b16 %v502
    %v698 = vunpack.c.h.b16 %v502
    %v699 = vunpack.c.l.b16 %v503
    %v700 = vunpack.c.h.b16 %v503
    %v701 = vunpack.c.l.b16 %v504
    %v702 = vunpack.c.h.b16 %v504
    %v703 = vunpack.c.l.b16 %v505
    %v704 = vunpack.c.h.b16 %v505
    %v705 = vunpack.c.l.b16 %v506
    %v706 = vunpack.c.h.b16 %v506
    %v707 = vunpack.c.l.b16 %v507
    %v708 = vunpack.c.h.b16 %v507
    %v709 = vunpack.c.l.b16 %v508
    %v710 = vunpack.c.h.b16 %v508
    %v711 = vunpack.c.l.b16 %v509
    %v712 = vunpack.c.h.b16 %v509
    %v713 = vunpack.c.l.b16 %v510
    %v714 = vunpack.c.h.b16 %v510
    %v715 = vunpack.c.l.b16 %v511
    %v716 = vunpack.c.h.b16 %v511
    %v717 = vunpack.c.l.b16 %v512
    %v718 = vunpack.c.h.b16 %v512
    %v719 = vunpack.c.l.b16 %v513
    %v720 = vunpack.c.h.b16 %v513
    %v721 = vunpack.c.l.b16 %v514
    %v722 = vunpack.c.h.b16 %v514
    %v723 = vunpack.c.l.b16 %v515
    %v724 = vunpack.c.h.b16 %v515
    %v725 = vunpack.c.l.b16 %v516
    %v726 = vunpack.c.h.b16 %v516
    %v727 = vunpack.c.l.b16 %v517
    %v728 = vunpack.c.h.b16 %v517
    %v729 = vunpack.c.l.b16 %v518
    %v730 = vunpack.c.h.b16 %v518
    %v731 = vunpack.c.l.b16 %v519
    %v732 = vunpack.c.h.b16 %v519
    %v733 = vunpack.c.l.b16 %v520
    %v734 = vunpack.c.h.b16 %v520
    %v735 = vpack.c.b16 %v611, %v607
    %v736 = vpack.c.b16 %v612, %v608
    %v737 = vpack.c.b16 %v613, %v609
    %v738 = vpack.c.b16 %v614, %v610
    %v739 = vpack.c.b16 %v619, %v615
    %v740 = vpack.c.b16 %v620, %v616
    %v741 = vpack.c.b16 %v621, %v617
    %v742 = vpack.c.b16 %v622, %v618
    %v743 = vpack.c.b16 %v627, %v623
    %v744 = vpack.c.b16 %v628, %v624
    %v745 = vpack.c.b16 %v629, %v625
    %v746 = vpack.c.b16 %v630, %v626
    %v747 = vpack.c.b16 %v635, %v631
    %v748 = vpack.c.b16 %v636, %v632
    %v749 = vpack.c.b16 %v637, %v633
    %v750 = vpack.c.b16 %v638, %v634
    %v751 = vpack.c.b16 %v643, %v639
    %v752 = vpack.c.b16 %v644, %v640
    %v753 = vpack.c.b16 %v645, %v641
    %v754 = vpack.c.b16 %v646, %v642
    %v755 = vpack.c.b16 %v651, %v647
    %v756 = vpack.c.b16 %v652, %v648
    %v757 = vpack.c.b16 %v653, %v649
    %v758 = vpack.c.b16 %v654, %v650
    %v759 = vpack.c.b16 %v659, %v655
    %v760 = vpack.c.b16 %v660, %v656
    %v761 = vpack.c.b16 %v661, %v657
    %v762 = vpack.c.b16 %v662, %v658
    %v763 = vpack.c.b16 %v667, %v663
    %v764 = vpack.c.b16 %v668, %v664
    %v765 = vpack.c.b16 %v669, %v665
    %v766 = vpack.c.b16 %v670, %v666
    %v767 = vpack.c.b16 %v675, %v671
    %v768 = vpack.c.b16 %v676, %v672
    %v769 = vpack.c.b16 %v677, %v673
    %v770 = vpack.c.b16 %v678, %v674
    %v771 = vpack.c.b16 %v683, %v679
    %v772 = vpack.c.b16 %v684, %v680
    %v773 = vpack.c.b16 %v685, %v681
    %v774 = vpack.c.b16 %v686, %v682
    %v775 = vpack.c.b16 %v691, %v687
    %v776 = vpack.c.b16 %v692, %v688
    %v777 = vpack.c.b16 %v693, %v689
    %v778 = vpack.c.b16 %v694, %v690
    %v779 = vpack.c.b16 %v699, %v695
    %v780 = vpack.c.b16 %v700, %v696
    %v781 = vpack.c.b16 %v701, %v697
    %v782 = vpack.c.b16 %v702, %v698
    %v783 = vpack.c.b16 %v707, %v703
    %v784 = vpack.c.b16 %v708, %v704
    %v785 = vpack.c.b16 %v709, %v705
    %v786 = vpack.c.b16 %v710, %v706
    %v787 = vpack.c.b16 %v715, %v711
    %v788 = vpack.c.b16 %v716, %v712
    %v789 = vpack.c.b16 %v717, %v713
    %v790 = vpack.c.b16 %v718, %v714
    %v791 = vpack.c.b16 %v723, %v719
    %v792 = vpack.c.b16 %v724, %v720
    %v793 = vpack.c.b16 %v725, %v721
    %v794 = vpack.c.b16 %v726, %v722
    %v795 = vpack.c.b16 %v731, %v727
    %v796 = vpack.c.b16 %v732, %v728
    %v797 = vpack.c.b16 %v733, %v729
    %v798 = vpack.c.b16 %v734, %v730
    %863 = vmatprep.subr.bf16.mxu0 %v736
    %864 = vmatpush1.bf16.msra.mxu0 %v735
    %865 = vmatprep.subr.bf16.mxu0 %v740
    %866 = vmatpush1.bf16.msra.mxu0 %v739
    %867 = vmatprep.subr.bf16.mxu0 %v744
    %868 = vmatpush1.bf16.msra.mxu0 %v743
    %869 = vmatprep.subr.bf16.mxu0 %v748
    %870 = vmatpush1.bf16.msra.mxu0 %v747
    %871 = vmatprep.subr.bf16.mxu0 %v752
    %872 = vmatpush1.bf16.msra.mxu0 %v751
    %873 = vmatprep.subr.bf16.mxu0 %v756
    %874 = vmatpush1.bf16.msra.mxu0 %v755
    %875 = vmatprep.subr.bf16.mxu0 %v760
    %876 = vmatpush1.bf16.msra.mxu0 %v759
    %877 = vmatprep.subr.bf16.mxu0 %v764
    %878 = vmatpush1.bf16.msra.mxu0 %v763
    %879 = vmatprep.subr.bf16.mxu0 %v768
    %880 = vmatpush1.bf16.msra.mxu0 %v767
    %881 = vmatprep.subr.bf16.mxu0 %v772
    %882 = vmatpush1.bf16.msra.mxu0 %v771
    %883 = vmatprep.subr.bf16.mxu0 %v776
    %884 = vmatpush1.bf16.msra.mxu0 %v775
    %885 = vmatprep.subr.bf16.mxu0 %v780
    %886 = vmatpush1.bf16.msra.mxu0 %v779
    %887 = vmatprep.subr.bf16.mxu0 %v784
    %888 = vmatpush1.bf16.msra.mxu0 %v783
    %889 = vmatprep.subr.bf16.mxu0 %v788
    %890 = vmatpush1.bf16.msra.mxu0 %v787
    %891 = vmatprep.subr.bf16.mxu0 %v792
    %892 = vmatpush1.bf16.msra.mxu0 %v791
    %893 = vmatprep.subr.bf16.mxu0 %v796
    %894 = vmatpush1.bf16.msra.mxu0 %v795
    %895 = vmatprep.mubr.bf16.mxu0 %v456
    %896 = vmatmul.mubr.bf16.gmra.mrb[0].mxu0 %v455
    %v897 = vpop.f32.mrb[0].mxu0
    %v898 = vadd.f32 %v526, %v897
    %v899 = vpop.f32.mrb[0].mxu0
    %v900 = vadd.f32 %v530, %v899
    %v901 = vpop.f32.mrb[0].mxu0
    %v902 = vpop.f32.mrb[0].mxu0
    %903 = vdwg.mxu0
    %904 = vmatprep.subr.bf16.mxu0 %v738
    %905 = vmatpush1.bf16.msra.mxu0 %v737
    %906 = vmatprep.subr.bf16.mxu0 %v742
    %907 = vmatpush1.bf16.msra.mxu0 %v741
    %908 = vmatprep.subr.bf16.mxu0 %v746
    %909 = vmatpush1.bf16.msra.mxu0 %v745
    %910 = vmatprep.subr.bf16.mxu0 %v750
    %911 = vmatpush1.bf16.msra.mxu0 %v749
    %912 = vmatprep.subr.bf16.mxu0 %v754
    %913 = vmatpush1.bf16.msra.mxu0 %v753
    %914 = vmatprep.subr.bf16.mxu0 %v758
    %915 = vmatpush1.bf16.msra.mxu0 %v757
    %916 = vmatprep.subr.bf16.mxu0 %v762
    %917 = vmatpush1.bf16.msra.mxu0 %v761
    %918 = vmatprep.subr.bf16.mxu0 %v766
    %919 = vmatpush1.bf16.msra.mxu0 %v765
    %920 = vmatprep.subr.bf16.mxu0 %v770
    %921 = vmatpush1.bf16.msra.mxu0 %v769
    %922 = vmatprep.subr.bf16.mxu0 %v774
    %923 = vmatpush1.bf16.msra.mxu0 %v773
    %924 = vmatprep.subr.bf16.mxu0 %v778
    %925 = vmatpush1.bf16.msra.mxu0 %v777
    %926 = vmatprep.subr.bf16.mxu0 %v782
    %927 = vmatpush1.bf16.msra.mxu0 %v781
    %928 = vmatprep.subr.bf16.mxu0 %v786
    %929 = vmatpush1.bf16.msra.mxu0 %v785
    %930 = vmatprep.subr.bf16.mxu0 %v790
    %931 = vmatpush1.bf16.msra.mxu0 %v789
    %932 = vmatprep.subr.bf16.mxu0 %v794
    %933 = vmatpush1.bf16.msra.mxu0 %v793
    %934 = vmatprep.subr.bf16.mxu0 %v798
    %935 = vmatpush1.bf16.msra.mxu0 %v797
    %936 = vmatprep.mubr.bf16.mxu0 %v456
    %937 = vmatmul.mubr.bf16.gmra.mrb[0].mxu0 %v455
    %v938 = vpop.f32.mrb[0].mxu0
    %v939 = vadd.f32 %v534, %v938
    %v940 = vpop.f32.mrb[0].mxu0
    %v941 = vadd.f32 %v538, %v940
    %v942 = vpop.f32.mrb[0].mxu0
    %v943 = vpop.f32.mrb[0].mxu0
    %944 = vdwg.mxu0
    %v945 = vmax.f32 %v898, 0.0
    %v946 = vmax.f32 %v900, 0.0
    %v947 = vmax.f32 %v939, 0.0
    %v948 = vmax.f32 %v941, 0.0
    %v949 = vpack.c.bf16 %v945, %v945
    %v950 = vpack.c.bf16 %v946, %v946
    %v951 = vpack.c.bf16 %v947, %v947
    %v952 = vpack.c.bf16 %v948, %v948
    %v953 = vld [vmem:[#allocation11] sm:$0xff]
    %v954 = vld [vmem:[#allocation11 + $0x8] sm:$0xff]
    %v955 = vld [vmem:[#allocation11 + $0x10] sm:$0xff]
    %v956 = vld [vmem:[#allocation11 + $0x18] sm:$0xf]
    %v957 = vld [vmem:[#allocation11 + $0x1c] sm:$0xff]
    %v958 = vld [vmem:[#allocation11 + $0x24] sm:$0xff]
    %v959 = vld [vmem:[#allocation11 + $0x2c] sm:$0xff]
    %v960 = vld [vmem:[#allocation11 + $0x34] sm:$0xf]
    %v961 = vld [vmem:[#allocation11 + $0x38] sm:$0xff]
    %v962 = vld [vmem:[#allocation11 + $0x40] sm:$0xff]
    %v963 = vld [vmem:[#allocation11 + $0x48] sm:$0xff]
    %v964 = vld [vmem:[#allocation11 + $0x50] sm:$0xf]
    %v965 = vld [vmem:[#allocation11 + $0x54] sm:$0xff]
    %v966 = vld [vmem:[#allocation11 + $0x5c] sm:$0xff]
    %v967 = vld [vmem:[#allocation11 + $0x64] sm:$0xff]
    %v968 = vld [vmem:[#allocation11 + $0x6c] sm:$0xf]
    %v969 = vld [vmem:[#allocation11 + $0x70] sm:$0xff]
    %v970 = vld [vmem:[#allocation11 + $0x78] sm:$0xff]
    %v971 = vld [vmem:[#allocation11 + $0x80] sm:$0xff]
    %v972 = vld [vmem:[#allocation11 + $0x88] sm:$0xf]
    %v973 = vld [vmem:[#allocation11 + $0x8c] sm:$0xff]
    %v974 = vld [vmem:[#allocation11 + $0x94] sm:$0xff]
    %v975 = vld [vmem:[#allocation11 + $0x9c] sm:$0xff]
    %v976 = vld [vmem:[#allocation11 + $0xa4] sm:$0xf]
    %v977 = vld [vmem:[#allocation11 + $0xa8] sm:$0xff]
    %v978 = vld [vmem:[#allocation11 + $0xb0] sm:$0xff]
    %v979 = vld [vmem:[#allocation11 + $0xb8] sm:$0xff]
    %v980 = vld [vmem:[#allocation11 + $0xc0] sm:$0xf]
    %v981 = vld [vmem:[#allocation11 + $0xc4] sm:$0xff]
    %v982 = vld [vmem:[#allocation11 + $0xcc] sm:$0xff]
    %v983 = vld [vmem:[#allocation11 + $0xd4] sm:$0xff]
    %v984 = vld [vmem:[#allocation11 + $0xdc] sm:$0xf]
    %v985 = vld [vmem:[#allocation11 + $0xe0] sm:$0xff]
    %v986 = vld [vmem:[#allocation11 + $0xe8] sm:$0xff]
    %v987 = vld [vmem:[#allocation11 + $0xf0] sm:$0xff]
    %v988 = vld [vmem:[#allocation11 + $0xf8] sm:$0xf]
    %v989 = vld [vmem:[#allocation11 + $0xfc] sm:$0xff]
    %v990 = vld [vmem:[#allocation11 + $0x104] sm:$0xff]
    %v991 = vld [vmem:[#allocation11 + $0x10c] sm:$0xff]
    %v992 = vld [vmem:[#allocation11 + $0x114] sm:$0xf]
    %v993 = vld [vmem:[#allocation11 + $0x118] sm:$0xff]
    %v994 = vld [vmem:[#allocation11 + $0x120] sm:$0xff]
    %v995 = vld [vmem:[#allocation11 + $0x128] sm:$0xff]
    %v996 = vld [vmem:[#allocation11 + $0x130] sm:$0xf]
    %v997 = vld [vmem:[#allocation11 + $0x134] sm:$0xff]
    %v998 = vld [vmem:[#allocation11 + $0x13c] sm:$0xff]
    %v999 = vld [vmem:[#allocation11 + $0x144] sm:$0xff]
    %v1000 = vld [vmem:[#allocation11 + $0x14c] sm:$0xf]
    %v1001 = vld [vmem:[#allocation11 + $0x150] sm:$0xff]
    %v1002 = vld [vmem:[#allocation11 + $0x158] sm:$0xff]
    %v1003 = vld [vmem:[#allocation11 + $0x160] sm:$0xff]
    %v1004 = vld [vmem:[#allocation11 + $0x168] sm:$0xf]
    %v1005 = vld [vmem:[#allocation11 + $0x16c] sm:$0xff]
    %v1006 = vld [vmem:[#allocation11 + $0x174] sm:$0xff]
    %v1007 = vld [vmem:[#allocation11 + $0x17c] sm:$0xff]
    %v1008 = vld [vmem:[#allocation11 + $0x184] sm:$0xf]
    %v1009 = vld [vmem:[#allocation11 + $0x188] sm:$0xff]
    %v1010 = vld [vmem:[#allocation11 + $0x190] sm:$0xff]
    %v1011 = vld [vmem:[#allocation11 + $0x198] sm:$0xff]
    %v1012 = vld [vmem:[#allocation11 + $0x1a0] sm:$0xf]
    %v1013 = vld [vmem:[#allocation11 + $0x1a4] sm:$0xff]
    %v1014 = vld [vmem:[#allocation11 + $0x1ac] sm:$0xff]
    %v1015 = vld [vmem:[#allocation11 + $0x1b4] sm:$0xff]
    %v1016 = vld [vmem:[#allocation11 + $0x1bc] sm:$0xf]
    %v1017 = vld [vmem:[#allocation11 + $0x1c0] sm:$0xff]
    %v1018 = vld [vmem:[#allocation11 + $0x1c8] sm:$0xff]
    %v1019 = vld [vmem:[#allocation11 + $0x1d0] sm:$0xff]
    %v1020 = vld [vmem:[#allocation11 + $0x1d8] sm:$0xf]
    %v1021 = vld [vmem:[#allocation11 + $0x1dc] sm:$0xff]
    %v1022 = vld [vmem:[#allocation11 + $0x1e4] sm:$0xff]
    %v1023 = vld [vmem:[#allocation11 + $0x1ec] sm:$0xff]
    %v1024 = vld [vmem:[#allocation11 + $0x1f4] sm:$0xf]
    %v1025 = vld [vmem:[#allocation11 + $0x1f8] sm:$0xff]
    %v1026 = vld [vmem:[#allocation11 + $0x200] sm:$0xff]
    %v1027 = vld [vmem:[#allocation11 + $0x208] sm:$0xff]
    %v1028 = vld [vmem:[#allocation11 + $0x210] sm:$0xf]
    %v1029 = vld [vmem:[#allocation11 + $0x214] sm:$0xff]
    %v1030 = vld [vmem:[#allocation11 + $0x21c] sm:$0xff]
    %v1031 = vld [vmem:[#allocation11 + $0x224] sm:$0xff]
    %v1032 = vld [vmem:[#allocation11 + $0x22c] sm:$0xf]
    %v1033 = vld [vmem:[#allocation11 + $0x230] sm:$0xff]
    %v1034 = vld [vmem:[#allocation11 + $0x238] sm:$0xff]
    %v1035 = vld [vmem:[#allocation11 + $0x240] sm:$0xff]
    %v1036 = vld [vmem:[#allocation11 + $0x248] sm:$0xf]
    %v1037 = vld [vmem:[#allocation11 + $0x24c] sm:$0xff]
    %v1038 = vld [vmem:[#allocation11 + $0x254] sm:$0xff]
    %v1039 = vld [vmem:[#allocation11 + $0x25c] sm:$0xff]
    %v1040 = vld [vmem:[#allocation11 + $0x264] sm:$0xf]
    %v1041 = vld [vmem:[#allocation11 + $0x268] sm:$0xff]
    %v1042 = vld [vmem:[#allocation11 + $0x270] sm:$0xff]
    %v1043 = vld [vmem:[#allocation11 + $0x278] sm:$0xff]
    %v1044 = vld [vmem:[#allocation11 + $0x280] sm:$0xf]
    %v1045 = vld [vmem:[#allocation11 + $0x284] sm:$0xff]
    %v1046 = vld [vmem:[#allocation11 + $0x28c] sm:$0xff]
    %v1047 = vld [vmem:[#allocation11 + $0x294] sm:$0xff]
    %v1048 = vld [vmem:[#allocation11 + $0x29c] sm:$0xf]
    %v1049 = vld [vmem:[#allocation11 + $0x2a0] sm:$0xff]
    %v1050 = vld [vmem:[#allocation11 + $0x2a8] sm:$0xff]
    %v1051 = vld [vmem:[#allocation11 + $0x2b0] sm:$0xff]
    %v1052 = vld [vmem:[#allocation11 + $0x2b8] sm:$0xf]
    %v1053 = vld [vmem:[#allocation11 + $0x2bc] sm:$0xff]
    %v1054 = vld [vmem:[#allocation11 + $0x2c4] sm:$0xff]
    %v1055 = vld [vmem:[#allocation11 + $0x2cc] sm:$0xff]
    %v1056 = vld [vmem:[#allocation11 + $0x2d4] sm:$0xf]
    %v1057 = vld [vmem:[#allocation11 + $0x2d8] sm:$0xff]
    %v1058 = vld [vmem:[#allocation11 + $0x2e0] sm:$0xff]
    %v1059 = vld [vmem:[#allocation11 + $0x2e8] sm:$0xff]
    %v1060 = vld [vmem:[#allocation11 + $0x2f0] sm:$0xf]
    %v1061 = vld [vmem:[#allocation11 + $0x2f4] sm:$0xff]
    %v1062 = vld [vmem:[#allocation11 + $0x2fc] sm:$0xff]
    %v1063 = vld [vmem:[#allocation11 + $0x304] sm:$0xff]
    %v1064 = vld [vmem:[#allocation11 + $0x30c] sm:$0xf]
    %v1065 = vld [vmem:[#allocation11 + $0x310] sm:$0xff]
    %v1066 = vld [vmem:[#allocation11 + $0x318] sm:$0xff]
    %v1067 = vld [vmem:[#allocation11 + $0x320] sm:$0xff]
    %v1068 = vld [vmem:[#allocation11 + $0x328] sm:$0xf]
    %v1069 = vld [vmem:[#allocation11 + $0x32c] sm:$0xff]
    %v1070 = vld [vmem:[#allocation11 + $0x334] sm:$0xff]
    %v1071 = vld [vmem:[#allocation11 + $0x33c] sm:$0xff]
    %v1072 = vld [vmem:[#allocation11 + $0x344] sm:$0xf]
    %v1073 = vld [vmem:[#allocation11 + $0x348] sm:$0xff]
    %v1074 = vld [vmem:[#allocation11 + $0x350] sm:$0xff]
    %v1075 = vld [vmem:[#allocation11 + $0x358] sm:$0xff]
    %v1076 = vld [vmem:[#allocation11 + $0x360] sm:$0xf]
    %v1077 = vld [vmem:[#allocation11 + $0x364] sm:$0xff]
    %v1078 = vld [vmem:[#allocation11 + $0x36c] sm:$0xff]
    %v1079 = vld [vmem:[#allocation11 + $0x374] sm:$0xff]
    %v1080 = vld [vmem:[#allocation11 + $0x37c] sm:$0xf]
    %v1081 = vld [vmem:[#allocation11 + $0x380] sm:$0xff]
    %v1082 = vld [vmem:[#allocation11 + $0x388] sm:$0xff]
    %v1083 = vld [vmem:[#allocation11 + $0x390] sm:$0xff]
    %v1084 = vld [vmem:[#allocation11 + $0x398] sm:$0xf]
    %v1085 = vld [vmem:[#allocation11 + $0x39c] sm:$0xff]
    %v1086 = vld [vmem:[#allocation11 + $0x3a4] sm:$0xff]
    %v1087 = vld [vmem:[#allocation11 + $0x3ac] sm:$0xff]
    %v1088 = vld [vmem:[#allocation11 + $0x3b4] sm:$0xf]
    %v1089 = vld [vmem:[#allocation11 + $0x3b8] sm:$0xff]
    %v1090 = vld [vmem:[#allocation11 + $0x3c0] sm:$0xff]
    %v1091 = vld [vmem:[#allocation11 + $0x3c8] sm:$0xff]
    %v1092 = vld [vmem:[#allocation11 + $0x3d0] sm:$0xf]
    %v1093 = vld [vmem:[#allocation11 + $0x3d4] sm:$0xff]
    %v1094 = vld [vmem:[#allocation11 + $0x3dc] sm:$0xff]
    %v1095 = vld [vmem:[#allocation11 + $0x3e4] sm:$0xff]
    %v1096 = vld [vmem:[#allocation11 + $0x3ec] sm:$0xf]
    %v1097 = vld [vmem:[#allocation11 + $0x3f0] sm:$0xff]
    %v1098 = vld [vmem:[#allocation11 + $0x3f8] sm:$0xff]
    %v1099 = vld [vmem:[#allocation11 + $0x400] sm:$0xff]
    %v1100 = vld [vmem:[#allocation11 + $0x408] sm:$0xf]
    %v1101 = vld [vmem:[#allocation11 + $0x40c] sm:$0xff]
    %v1102 = vld [vmem:[#allocation11 + $0x414] sm:$0xff]
    %v1103 = vld [vmem:[#allocation11 + $0x41c] sm:$0xff]
    %v1104 = vld [vmem:[#allocation11 + $0x424] sm:$0xf]
    %v1105 = vld [vmem:[#allocation11 + $0x428] sm:$0xff]
    %v1106 = vld [vmem:[#allocation11 + $0x430] sm:$0xff]
    %v1107 = vld [vmem:[#allocation11 + $0x438] sm:$0xff]
    %v1108 = vld [vmem:[#allocation11 + $0x440] sm:$0xf]
    %v1109 = vld [vmem:[#allocation11 + $0x444] sm:$0xff]
    %v1110 = vld [vmem:[#allocation11 + $0x44c] sm:$0xff]
    %v1111 = vld [vmem:[#allocation11 + $0x454] sm:$0xff]
    %v1112 = vld [vmem:[#allocation11 + $0x45c] sm:$0xf]
    %v1113 = vld [vmem:[#allocation11 + $0x460] sm:$0xff]
    %v1114 = vld [vmem:[#allocation11 + $0x468] sm:$0xff]
    %v1115 = vld [vmem:[#allocation11 + $0x470] sm:$0xff]
    %v1116 = vld [vmem:[#allocation11 + $0x478] sm:$0xf]
    %v1117 = vld [vmem:[#allocation11 + $0x47c] sm:$0xff]
    %v1118 = vld [vmem:[#allocation11 + $0x484] sm:$0xff]
    %v1119 = vld [vmem:[#allocation11 + $0x48c] sm:$0xff]
    %v1120 = vld [vmem:[#allocation11 + $0x494] sm:$0xf]
    %v1121 = vld [vmem:[#allocation11 + $0x498] sm:$0xff]
    %v1122 = vld [vmem:[#allocation11 + $0x4a0] sm:$0xff]
    %v1123 = vld [vmem:[#allocation11 + $0x4a8] sm:$0xff]
    %v1124 = vld [vmem:[#allocation11 + $0x4b0] sm:$0xf]
    %v1125 = vld [vmem:[#allocation11 + $0x4b4] sm:$0xff]
    %v1126 = vld [vmem:[#allocation11 + $0x4bc] sm:$0xff]
    %v1127 = vld [vmem:[#allocation11 + $0x4c4] sm:$0xff]
    %v1128 = vld [vmem:[#allocation11 + $0x4cc] sm:$0xf]
    %v1129 = vld [vmem:[#allocation11 + $0x4d0] sm:$0xff]
    %v1130 = vld [vmem:[#allocation11 + $0x4d8] sm:$0xff]
    %v1131 = vld [vmem:[#allocation11 + $0x4e0] sm:$0xff]
    %v1132 = vld [vmem:[#allocation11 + $0x4e8] sm:$0xf]
    %v1133 = vld [vmem:[#allocation11 + $0x4ec] sm:$0xff]
    %v1134 = vld [vmem:[#allocation11 + $0x4f4] sm:$0xff]
    %v1135 = vld [vmem:[#allocation11 + $0x4fc] sm:$0xff]
    %v1136 = vld [vmem:[#allocation11 + $0x504] sm:$0xf]
    %v1137 = vld [vmem:[#allocation11 + $0x508] sm:$0xff]
    %v1138 = vld [vmem:[#allocation11 + $0x510] sm:$0xff]
    %v1139 = vld [vmem:[#allocation11 + $0x518] sm:$0xff]
    %v1140 = vld [vmem:[#allocation11 + $0x520] sm:$0xf]
    %v1141 = vld [vmem:[#allocation11 + $0x524] sm:$0xff]
    %v1142 = vld [vmem:[#allocation11 + $0x52c] sm:$0xff]
    %v1143 = vld [vmem:[#allocation11 + $0x534] sm:$0xff]
    %v1144 = vld [vmem:[#allocation11 + $0x53c] sm:$0xf]
    %v1145 = vld [vmem:[#allocation11 + $0x540] sm:$0xff]
    %v1146 = vld [vmem:[#allocation11 + $0x548] sm:$0xff]
    %v1147 = vld [vmem:[#allocation11 + $0x550] sm:$0xff]
    %v1148 = vld [vmem:[#allocation11 + $0x558] sm:$0xf]
    %v1149 = vld [vmem:[#allocation11 + $0x55c] sm:$0xff]
    %v1150 = vld [vmem:[#allocation11 + $0x564] sm:$0xff]
    %v1151 = vld [vmem:[#allocation11 + $0x56c] sm:$0xff]
    %v1152 = vld [vmem:[#allocation11 + $0x574] sm:$0xf]
    %v1153 = vld [vmem:[#allocation11 + $0x578] sm:$0xff]
    %v1154 = vld [vmem:[#allocation11 + $0x580] sm:$0xff]
    %v1155 = vld [vmem:[#allocation11 + $0x588] sm:$0xff]
    %v1156 = vld [vmem:[#allocation11 + $0x590] sm:$0xf]
    %v1157 = vld [vmem:[#allocation11 + $0x594] sm:$0xff]
    %v1158 = vld [vmem:[#allocation11 + $0x59c] sm:$0xff]
    %v1159 = vld [vmem:[#allocation11 + $0x5a4] sm:$0xff]
    %v1160 = vld [vmem:[#allocation11 + $0x5ac] sm:$0xf]
    %v1161 = vld [vmem:[#allocation11 + $0x5b0] sm:$0xff]
    %v1162 = vld [vmem:[#allocation11 + $0x5b8] sm:$0xff]
    %v1163 = vld [vmem:[#allocation11 + $0x5c0] sm:$0xff]
    %v1164 = vld [vmem:[#allocation11 + $0x5c8] sm:$0xf]
    %v1165 = vld [vmem:[#allocation11 + $0x5cc] sm:$0xff]
    %v1166 = vld [vmem:[#allocation11 + $0x5d4] sm:$0xff]
    %v1167 = vld [vmem:[#allocation11 + $0x5dc] sm:$0xff]
    %v1168 = vld [vmem:[#allocation11 + $0x5e4] sm:$0xf]
    %v1169 = vld [vmem:[#allocation11 + $0x5e8] sm:$0xff]
    %v1170 = vld [vmem:[#allocation11 + $0x5f0] sm:$0xff]
    %v1171 = vld [vmem:[#allocation11 + $0x5f8] sm:$0xff]
    %v1172 = vld [vmem:[#allocation11 + $0x600] sm:$0xf]
    %v1173 = vld [vmem:[#allocation11 + $0x604] sm:$0xff]
    %v1174 = vld [vmem:[#allocation11 + $0x60c] sm:$0xff]
    %v1175 = vld [vmem:[#allocation11 + $0x614] sm:$0xff]
    %v1176 = vld [vmem:[#allocation11 + $0x61c] sm:$0xf]
    %v1177 = vld [vmem:[#allocation11 + $0x620] sm:$0xff]
    %v1178 = vld [vmem:[#allocation11 + $0x628] sm:$0xff]
    %v1179 = vld [vmem:[#allocation11 + $0x630] sm:$0xff]
    %v1180 = vld [vmem:[#allocation11 + $0x638] sm:$0xf]
    %v1181 = vld [vmem:[#allocation11 + $0x63c] sm:$0xff]
    %v1182 = vld [vmem:[#allocation11 + $0x644] sm:$0xff]
    %v1183 = vld [vmem:[#allocation11 + $0x64c] sm:$0xff]
    %v1184 = vld [vmem:[#allocation11 + $0x654] sm:$0xf]
    %v1185 = vld [vmem:[#allocation11 + $0x658] sm:$0xff]
    %v1186 = vld [vmem:[#allocation11 + $0x660] sm:$0xff]
    %v1187 = vld [vmem:[#allocation11 + $0x668] sm:$0xff]
    %v1188 = vld [vmem:[#allocation11 + $0x670] sm:$0xf]
    %v1189 = vld [vmem:[#allocation11 + $0x674] sm:$0xff]
    %v1190 = vld [vmem:[#allocation11 + $0x67c] sm:$0xff]
    %v1191 = vld [vmem:[#allocation11 + $0x684] sm:$0xff]
    %v1192 = vld [vmem:[#allocation11 + $0x68c] sm:$0xf]
    %v1193 = vld [vmem:[#allocation11 + $0x690] sm:$0xff]
    %v1194 = vld [vmem:[#allocation11 + $0x698] sm:$0xff]
    %v1195 = vld [vmem:[#allocation11 + $0x6a0] sm:$0xff]
    %v1196 = vld [vmem:[#allocation11 + $0x6a8] sm:$0xf]
    %v1197 = vld [vmem:[#allocation11 + $0x6ac] sm:$0xff]
    %v1198 = vld [vmem:[#allocation11 + $0x6b4] sm:$0xff]
    %v1199 = vld [vmem:[#allocation11 + $0x6bc] sm:$0xff]
    %v1200 = vld [vmem:[#allocation11 + $0x6c4] sm:$0xf]
    %v1201 = vld [vmem:[#allocation11 + $0x6c8] sm:$0xff]
    %v1202 = vld [vmem:[#allocation11 + $0x6d0] sm:$0xff]
    %v1203 = vld [vmem:[#allocation11 + $0x6d8] sm:$0xff]
    %v1204 = vld [vmem:[#allocation11 + $0x6e0] sm:$0xf]
    %v1205 = vld [vmem:[#allocation11 + $0x6e4] sm:$0xff]
    %v1206 = vld [vmem:[#allocation11 + $0x6ec] sm:$0xff]
    %v1207 = vld [vmem:[#allocation11 + $0x6f4] sm:$0xff]
    %v1208 = vld [vmem:[#allocation11 + $0x6fc] sm:$0xf]
    %v1209 = vld [vmem:[%s10] sm:$0xff]
    %v1211 = vlaneseq
    %v1212 = vshrl.u32 %v1211, 7
    %v1213 = vsub.s32 0, %v1212
    %v1214 = vrot.slane %v1209, %v1213
    %v1215 = vlaneseq
    %v1216 = vshrl.u32 %v1215, 7
    %v1217 = vsub.s32 1, %v1216
    %v1218 = vrot.slane %v1209, %v1217
    %v1219 = vlaneseq
    %v1220 = vshrl.u32 %v1219, 7
    %v1221 = vsub.s32 2, %v1220
    %v1222 = vrot.slane %v1209, %v1221
    %v1223 = vlaneseq
    %v1224 = vshrl.u32 %v1223, 7
    %v1225 = vsub.s32 3, %v1224
    %v1226 = vrot.slane %v1209, %v1225
    %v1227 = vlaneseq
    %v1228 = vshrl.u32 %v1227, 7
    %v1229 = vsub.s32 4, %v1228
    %v1230 = vrot.slane %v1209, %v1229
    %v1231 = vlaneseq
    %v1232 = vshrl.u32 %v1231, 7
    %v1233 = vsub.s32 5, %v1232
    %v1234 = vrot.slane %v1209, %v1233
    %v1235 = vlaneseq
    %v1236 = vshrl.u32 %v1235, 7
    %v1237 = vsub.s32 6, %v1236
    %v1238 = vrot.slane %v1209, %v1237
    %v1502 = vunpack.c.l.b16 %v953
    %v1503 = vunpack.c.h.b16 %v953
    %v1504 = vunpack.c.l.b16 %v954
    %v1505 = vunpack.c.h.b16 %v954
    %v1506 = vunpack.c.l.b16 %v955
    %v1507 = vunpack.c.h.b16 %v955
    %v1508 = vunpack.c.l.b16 %v956
    %v1509 = vunpack.c.l.b16 %v957
    %v1510 = vunpack.c.h.b16 %v957
    %v1511 = vunpack.c.l.b16 %v958
    %v1512 = vunpack.c.h.b16 %v958
    %v1513 = vunpack.c.l.b16 %v959
    %v1514 = vunpack.c.h.b16 %v959
    %v1515 = vunpack.c.l.b16 %v960
    %v1516 = vunpack.c.l.b16 %v961
    %v1517 = vunpack.c.h.b16 %v961
    %v1518 = vunpack.c.l.b16 %v962
    %v1519 = vunpack.c.h.b16 %v962
    %v1520 = vunpack.c.l.b16 %v963
    %v1521 = vunpack.c.h.b16 %v963
    %v1522 = vunpack.c.l.b16 %v964
    %v1523 = vunpack.c.l.b16 %v965
    %v1524 = vunpack.c.h.b16 %v965
    %v1525 = vunpack.c.l.b16 %v966
    %v1526 = vunpack.c.h.b16 %v966
    %v1527 = vunpack.c.l.b16 %v967
    %v1528 = vunpack.c.h.b16 %v967
    %v1529 = vunpack.c.l.b16 %v968
    %v1530 = vunpack.c.l.b16 %v969
    %v1531 = vunpack.c.h.b16 %v969
    %v1532 = vunpack.c.l.b16 %v970
    %v1533 = vunpack.c.h.b16 %v970
    %v1534 = vunpack.c.l.b16 %v971
    %v1535 = vunpack.c.h.b16 %v971
    %v1536 = vunpack.c.l.b16 %v972
    %v1537 = vunpack.c.l.b16 %v973
    %v1538 = vunpack.c.h.b16 %v973
    %v1539 = vunpack.c.l.b16 %v974
    %v1540 = vunpack.c.h.b16 %v974
    %v1541 = vunpack.c.l.b16 %v975
    %v1542 = vunpack.c.h.b16 %v975
    %v1543 = vunpack.c.l.b16 %v976
    %v1544 = vunpack.c.l.b16 %v977
    %v1545 = vunpack.c.h.b16 %v977
    %v1546 = vunpack.c.l.b16 %v978
    %v1547 = vunpack.c.h.b16 %v978
    %v1548 = vunpack.c.l.b16 %v979
    %v1549 = vunpack.c.h.b16 %v979
    %v1550 = vunpack.c.l.b16 %v980
    %v1551 = vunpack.c.l.b16 %v981
    %v1552 = vunpack.c.h.b16 %v981
    %v1553 = vunpack.c.l.b16 %v982
    %v1554 = vunpack.c.h.b16 %v982
    %v1555 = vunpack.c.l.b16 %v983
    %v1556 = vunpack.c.h.b16 %v983
    %v1557 = vunpack.c.l.b16 %v984
    %v1558 = vunpack.c.l.b16 %v985
    %v1559 = vunpack.c.h.b16 %v985
    %v1560 = vunpack.c.l.b16 %v986
    %v1561 = vunpack.c.h.b16 %v986
    %v1562 = vunpack.c.l.b16 %v987
    %v1563 = vunpack.c.h.b16 %v987
    %v1564 = vunpack.c.l.b16 %v988
    %v1565 = vunpack.c.l.b16 %v989
    %v1566 = vunpack.c.h.b16 %v989
    %v1567 = vunpack.c.l.b16 %v990
    %v1568 = vunpack.c.h.b16 %v990
    %v1569 = vunpack.c.l.b16 %v991
    %v1570 = vunpack.c.h.b16 %v991
    %v1571 = vunpack.c.l.b16 %v992
    %v1572 = vunpack.c.l.b16 %v993
    %v1573 = vunpack.c.h.b16 %v993
    %v1574 = vunpack.c.l.b16 %v994
    %v1575 = vunpack.c.h.b16 %v994
    %v1576 = vunpack.c.l.b16 %v995
    %v1577 = vunpack.c.h.b16 %v995
    %v1578 = vunpack.c.l.b16 %v996
    %v1579 = vunpack.c.l.b16 %v997
    %v1580 = vunpack.c.h.b16 %v997
    %v1581 = vunpack.c.l.b16 %v998
    %v1582 = vunpack.c.h.b16 %v998
    %v1583 = vunpack.c.l.b16 %v999
    %v1584 = vunpack.c.h.b16 %v999
    %v1585 = vunpack.c.l.b16 %v1000
    %v1586 = vunpack.c.l.b16 %v1001
    %v1587 = vunpack.c.h.b16 %v1001
    %v1588 = vunpack.c.l.b16 %v1002
    %v1589 = vunpack.c.h.b16 %v1002
    %v1590 = vunpack.c.l.b16 %v1003
    %v1591 = vunpack.c.h.b16 %v1003
    %v1592 = vunpack.c.l.b16 %v1004
    %v1593 = vunpack.c.l.b16 %v1005
    %v1594 = vunpack.c.h.b16 %v1005
    %v1595 = vunpack.c.l.b16 %v1006
    %v1596 = vunpack.c.h.b16 %v1006
    %v1597 = vunpack.c.l.b16 %v1007
    %v1598 = vunpack.c.h.b16 %v1007
    %v1599 = vunpack.c.l.b16 %v1008
    %v1600 = vunpack.c.l.b16 %v1009
    %v1601 = vunpack.c.h.b16 %v1009
    %v1602 = vunpack.c.l.b16 %v1010
    %v1603 = vunpack.c.h.b16 %v1010
    %v1604 = vunpack.c.l.b16 %v1011
    %v1605 = vunpack.c.h.b16 %v1011
    %v1606 = vunpack.c.l.b16 %v1012
    %v1607 = vunpack.c.l.b16 %v1013
    %v1608 = vunpack.c.h.b16 %v1013
    %v1609 = vunpack.c.l.b16 %v1014
    %v1610 = vunpack.c.h.b16 %v1014
    %v1611 = vunpack.c.l.b16 %v1015
    %v1612 = vunpack.c.h.b16 %v1015
    %v1613 = vunpack.c.l.b16 %v1016
    %v1614 = vunpack.c.l.b16 %v1017
    %v1615 = vunpack.c.h.b16 %v1017
    %v1616 = vunpack.c.l.b16 %v1018
    %v1617 = vunpack.c.h.b16 %v1018
    %v1618 = vunpack.c.l.b16 %v1019
    %v1619 = vunpack.c.h.b16 %v1019
    %v1620 = vunpack.c.l.b16 %v1020
    %v1621 = vunpack.c.l.b16 %v1021
    %v1622 = vunpack.c.h.b16 %v1021
    %v1623 = vunpack.c.l.b16 %v1022
    %v1624 = vunpack.c.h.b16 %v1022
    %v1625 = vunpack.c.l.b16 %v1023
    %v1626 = vunpack.c.h.b16 %v1023
    %v1627 = vunpack.c.l.b16 %v1024
    %v1628 = vunpack.c.l.b16 %v1025
    %v1629 = vunpack.c.h.b16 %v1025
    %v1630 = vunpack.c.l.b16 %v1026
    %v1631 = vunpack.c.h.b16 %v1026
    %v1632 = vunpack.c.l.b16 %v1027
    %v1633 = vunpack.c.h.b16 %v1027
    %v1634 = vunpack.c.l.b16 %v1028
    %v1635 = vunpack.c.l.b16 %v1029
    %v1636 = vunpack.c.h.b16 %v1029
    %v1637 = vunpack.c.l.b16 %v1030
    %v1638 = vunpack.c.h.b16 %v1030
    %v1639 = vunpack.c.l.b16 %v1031
    %v1640 = vunpack.c.h.b16 %v1031
    %v1641 = vunpack.c.l.b16 %v1032
    %v1642 = vunpack.c.l.b16 %v1033
    %v1643 = vunpack.c.h.b16 %v1033
    %v1644 = vunpack.c.l.b16 %v1034
    %v1645 = vunpack.c.h.b16 %v1034
    %v1646 = vunpack.c.l.b16 %v1035
    %v1647 = vunpack.c.h.b16 %v1035
    %v1648 = vunpack.c.l.b16 %v1036
    %v1649 = vunpack.c.l.b16 %v1037
    %v1650 = vunpack.c.h.b16 %v1037
    %v1651 = vunpack.c.l.b16 %v1038
    %v1652 = vunpack.c.h.b16 %v1038
    %v1653 = vunpack.c.l.b16 %v1039
    %v1654 = vunpack.c.h.b16 %v1039
    %v1655 = vunpack.c.l.b16 %v1040
    %v1656 = vunpack.c.l.b16 %v1041
    %v1657 = vunpack.c.h.b16 %v1041
    %v1658 = vunpack.c.l.b16 %v1042
    %v1659 = vunpack.c.h.b16 %v1042
    %v1660 = vunpack.c.l.b16 %v1043
    %v1661 = vunpack.c.h.b16 %v1043
    %v1662 = vunpack.c.l.b16 %v1044
    %v1663 = vunpack.c.l.b16 %v1045
    %v1664 = vunpack.c.h.b16 %v1045
    %v1665 = vunpack.c.l.b16 %v1046
    %v1666 = vunpack.c.h.b16 %v1046
    %v1667 = vunpack.c.l.b16 %v1047
    %v1668 = vunpack.c.h.b16 %v1047
    %v1669 = vunpack.c.l.b16 %v1048
    %v1670 = vunpack.c.l.b16 %v1049
    %v1671 = vunpack.c.h.b16 %v1049
    %v1672 = vunpack.c.l.b16 %v1050
    %v1673 = vunpack.c.h.b16 %v1050
    %v1674 = vunpack.c.l.b16 %v1051
    %v1675 = vunpack.c.h.b16 %v1051
    %v1676 = vunpack.c.l.b16 %v1052
    %v1677 = vunpack.c.l.b16 %v1053
    %v1678 = vunpack.c.h.b16 %v1053
    %v1679 = vunpack.c.l.b16 %v1054
    %v1680 = vunpack.c.h.b16 %v1054
    %v1681 = vunpack.c.l.b16 %v1055
    %v1682 = vunpack.c.h.b16 %v1055
    %v1683 = vunpack.c.l.b16 %v1056
    %v1684 = vunpack.c.l.b16 %v1057
    %v1685 = vunpack.c.h.b16 %v1057
    %v1686 = vunpack.c.l.b16 %v1058
    %v1687 = vunpack.c.h.b16 %v1058
    %v1688 = vunpack.c.l.b16 %v1059
    %v1689 = vunpack.c.h.b16 %v1059
    %v1690 = vunpack.c.l.b16 %v1060
    %v1691 = vunpack.c.l.b16 %v1061
    %v1692 = vunpack.c.h.b16 %v1061
    %v1693 = vunpack.c.l.b16 %v1062
    %v1694 = vunpack.c.h.b16 %v1062
    %v1695 = vunpack.c.l.b16 %v1063
    %v1696 = vunpack.c.h.b16 %v1063
    %v1697 = vunpack.c.l.b16 %v1064
    %v1698 = vunpack.c.l.b16 %v1065
    %v1699 = vunpack.c.h.b16 %v1065
    %v1700 = vunpack.c.l.b16 %v1066
    %v1701 = vunpack.c.h.b16 %v1066
    %v1702 = vunpack.c.l.b16 %v1067
    %v1703 = vunpack.c.h.b16 %v1067
    %v1704 = vunpack.c.l.b16 %v1068
    %v1705 = vunpack.c.l.b16 %v1069
    %v1706 = vunpack.c.h.b16 %v1069
    %v1707 = vunpack.c.l.b16 %v1070
    %v1708 = vunpack.c.h.b16 %v1070
    %v1709 = vunpack.c.l.b16 %v1071
    %v1710 = vunpack.c.h.b16 %v1071
    %v1711 = vunpack.c.l.b16 %v1072
    %v1712 = vunpack.c.l.b16 %v1073
    %v1713 = vunpack.c.h.b16 %v1073
    %v1714 = vunpack.c.l.b16 %v1074
    %v1715 = vunpack.c.h.b16 %v1074
    %v1716 = vunpack.c.l.b16 %v1075
    %v1717 = vunpack.c.h.b16 %v1075
    %v1718 = vunpack.c.l.b16 %v1076
    %v1719 = vunpack.c.l.b16 %v1077
    %v1720 = vunpack.c.h.b16 %v1077
    %v1721 = vunpack.c.l.b16 %v1078
    %v1722 = vunpack.c.h.b16 %v1078
    %v1723 = vunpack.c.l.b16 %v1079
    %v1724 = vunpack.c.h.b16 %v1079
    %v1725 = vunpack.c.l.b16 %v1080
    %v1726 = vunpack.c.l.b16 %v1081
    %v1727 = vunpack.c.h.b16 %v1081
    %v1728 = vunpack.c.l.b16 %v1082
    %v1729 = vunpack.c.h.b16 %v1082
    %v1730 = vunpack.c.l.b16 %v1083
    %v1731 = vunpack.c.h.b16 %v1083
    %v1732 = vunpack.c.l.b16 %v1084
    %v1733 = vunpack.c.l.b16 %v1085
    %v1734 = vunpack.c.h.b16 %v1085
    %v1735 = vunpack.c.l.b16 %v1086
    %v1736 = vunpack.c.h.b16 %v1086
    %v1737 = vunpack.c.l.b16 %v1087
    %v1738 = vunpack.c.h.b16 %v1087
    %v1739 = vunpack.c.l.b16 %v1088
    %v1740 = vunpack.c.l.b16 %v1089
    %v1741 = vunpack.c.h.b16 %v1089
    %v1742 = vunpack.c.l.b16 %v1090
    %v1743 = vunpack.c.h.b16 %v1090
    %v1744 = vunpack.c.l.b16 %v1091
    %v1745 = vunpack.c.h.b16 %v1091
    %v1746 = vunpack.c.l.b16 %v1092
    %v1747 = vunpack.c.l.b16 %v1093
    %v1748 = vunpack.c.h.b16 %v1093
    %v1749 = vunpack.c.l.b16 %v1094
    %v1750 = vunpack.c.h.b16 %v1094
    %v1751 = vunpack.c.l.b16 %v1095
    %v1752 = vunpack.c.h.b16 %v1095
    %v1753 = vunpack.c.l.b16 %v1096
    %v1754 = vunpack.c.l.b16 %v1097
    %v1755 = vunpack.c.h.b16 %v1097
    %v1756 = vunpack.c.l.b16 %v1098
    %v1757 = vunpack.c.h.b16 %v1098
    %v1758 = vunpack.c.l.b16 %v1099
    %v1759 = vunpack.c.h.b16 %v1099
    %v1760 = vunpack.c.l.b16 %v1100
    %v1761 = vunpack.c.l.b16 %v1101
    %v1762 = vunpack.c.h.b16 %v1101
    %v1763 = vunpack.c.l.b16 %v1102
    %v1764 = vunpack.c.h.b16 %v1102
    %v1765 = vunpack.c.l.b16 %v1103
    %v1766 = vunpack.c.h.b16 %v1103
    %v1767 = vunpack.c.l.b16 %v1104
    %v1768 = vunpack.c.l.b16 %v1105
    %v1769 = vunpack.c.h.b16 %v1105
    %v1770 = vunpack.c.l.b16 %v1106
    %v1771 = vunpack.c.h.b16 %v1106
    %v1772 = vunpack.c.l.b16 %v1107
    %v1773 = vunpack.c.h.b16 %v1107
    %v1774 = vunpack.c.l.b16 %v1108
    %v1775 = vunpack.c.l.b16 %v1109
    %v1776 = vunpack.c.h.b16 %v1109
    %v1777 = vunpack.c.l.b16 %v1110
    %v1778 = vunpack.c.h.b16 %v1110
    %v1779 = vunpack.c.l.b16 %v1111
    %v1780 = vunpack.c.h.b16 %v1111
    %v1781 = vunpack.c.l.b16 %v1112
    %v1782 = vunpack.c.l.b16 %v1113
    %v1783 = vunpack.c.h.b16 %v1113
    %v1784 = vunpack.c.l.b16 %v1114
    %v1785 = vunpack.c.h.b16 %v1114
    %v1786 = vunpack.c.l.b16 %v1115
    %v1787 = vunpack.c.h.b16 %v1115
    %v1788 = vunpack.c.l.b16 %v1116
    %v1789 = vunpack.c.l.b16 %v1117
    %v1790 = vunpack.c.h.b16 %v1117
    %v1791 = vunpack.c.l.b16 %v1118
    %v1792 = vunpack.c.h.b16 %v1118
    %v1793 = vunpack.c.l.b16 %v1119
    %v1794 = vunpack.c.h.b16 %v1119
    %v1795 = vunpack.c.l.b16 %v1120
    %v1796 = vunpack.c.l.b16 %v1121
    %v1797 = vunpack.c.h.b16 %v1121
    %v1798 = vunpack.c.l.b16 %v1122
    %v1799 = vunpack.c.h.b16 %v1122
    %v1800 = vunpack.c.l.b16 %v1123
    %v1801 = vunpack.c.h.b16 %v1123
    %v1802 = vunpack.c.l.b16 %v1124
    %v1803 = vunpack.c.l.b16 %v1125
    %v1804 = vunpack.c.h.b16 %v1125
    %v1805 = vunpack.c.l.b16 %v1126
    %v1806 = vunpack.c.h.b16 %v1126
    %v1807 = vunpack.c.l.b16 %v1127
    %v1808 = vunpack.c.h.b16 %v1127
    %v1809 = vunpack.c.l.b16 %v1128
    %v1810 = vunpack.c.l.b16 %v1129
    %v1811 = vunpack.c.h.b16 %v1129
    %v1812 = vunpack.c.l.b16 %v1130
    %v1813 = vunpack.c.h.b16 %v1130
    %v1814 = vunpack.c.l.b16 %v1131
    %v1815 = vunpack.c.h.b16 %v1131
    %v1816 = vunpack.c.l.b16 %v1132
    %v1817 = vunpack.c.l.b16 %v1133
    %v1818 = vunpack.c.h.b16 %v1133
    %v1819 = vunpack.c.l.b16 %v1134
    %v1820 = vunpack.c.h.b16 %v1134
    %v1821 = vunpack.c.l.b16 %v1135
    %v1822 = vunpack.c.h.b16 %v1135
    %v1823 = vunpack.c.l.b16 %v1136
    %v1824 = vunpack.c.l.b16 %v1137
    %v1825 = vunpack.c.h.b16 %v1137
    %v1826 = vunpack.c.l.b16 %v1138
    %v1827 = vunpack.c.h.b16 %v1138
    %v1828 = vunpack.c.l.b16 %v1139
    %v1829 = vunpack.c.h.b16 %v1139
    %v1830 = vunpack.c.l.b16 %v1140
    %v1831 = vunpack.c.l.b16 %v1141
    %v1832 = vunpack.c.h.b16 %v1141
    %v1833 = vunpack.c.l.b16 %v1142
    %v1834 = vunpack.c.h.b16 %v1142
    %v1835 = vunpack.c.l.b16 %v1143
    %v1836 = vunpack.c.h.b16 %v1143
    %v1837 = vunpack.c.l.b16 %v1144
    %v1838 = vunpack.c.l.b16 %v1145
    %v1839 = vunpack.c.h.b16 %v1145
    %v1840 = vunpack.c.l.b16 %v1146
    %v1841 = vunpack.c.h.b16 %v1146
    %v1842 = vunpack.c.l.b16 %v1147
    %v1843 = vunpack.c.h.b16 %v1147
    %v1844 = vunpack.c.l.b16 %v1148
    %v1845 = vunpack.c.l.b16 %v1149
    %v1846 = vunpack.c.h.b16 %v1149
    %v1847 = vunpack.c.l.b16 %v1150
    %v1848 = vunpack.c.h.b16 %v1150
    %v1849 = vunpack.c.l.b16 %v1151
    %v1850 = vunpack.c.h.b16 %v1151
    %v1851 = vunpack.c.l.b16 %v1152
    %v1852 = vunpack.c.l.b16 %v1153
    %v1853 = vunpack.c.h.b16 %v1153
    %v1854 = vunpack.c.l.b16 %v1154
    %v1855 = vunpack.c.h.b16 %v1154
    %v1856 = vunpack.c.l.b16 %v1155
    %v1857 = vunpack.c.h.b16 %v1155
    %v1858 = vunpack.c.l.b16 %v1156
    %v1859 = vunpack.c.l.b16 %v1157
    %v1860 = vunpack.c.h.b16 %v1157
    %v1861 = vunpack.c.l.b16 %v1158
    %v1862 = vunpack.c.h.b16 %v1158
    %v1863 = vunpack.c.l.b16 %v1159
    %v1864 = vunpack.c.h.b16 %v1159
    %v1865 = vunpack.c.l.b16 %v1160
    %v1866 = vunpack.c.l.b16 %v1161
    %v1867 = vunpack.c.h.b16 %v1161
    %v1868 = vunpack.c.l.b16 %v1162
    %v1869 = vunpack.c.h.b16 %v1162
    %v1870 = vunpack.c.l.b16 %v1163
    %v1871 = vunpack.c.h.b16 %v1163
    %v1872 = vunpack.c.l.b16 %v1164
    %v1873 = vunpack.c.l.b16 %v1165
    %v1874 = vunpack.c.h.b16 %v1165
    %v1875 = vunpack.c.l.b16 %v1166
    %v1876 = vunpack.c.h.b16 %v1166
    %v1877 = vunpack.c.l.b16 %v1167
    %v1878 = vunpack.c.h.b16 %v1167
    %v1879 = vunpack.c.l.b16 %v1168
    %v1880 = vunpack.c.l.b16 %v1169
    %v1881 = vunpack.c.h.b16 %v1169
    %v1882 = vunpack.c.l.b16 %v1170
    %v1883 = vunpack.c.h.b16 %v1170
    %v1884 = vunpack.c.l.b16 %v1171
    %v1885 = vunpack.c.h.b16 %v1171
    %v1886 = vunpack.c.l.b16 %v1172
    %v1887 = vunpack.c.l.b16 %v1173
    %v1888 = vunpack.c.h.b16 %v1173
    %v1889 = vunpack.c.l.b16 %v1174
    %v1890 = vunpack.c.h.b16 %v1174
    %v1891 = vunpack.c.l.b16 %v1175
    %v1892 = vunpack.c.h.b16 %v1175
    %v1893 = vunpack.c.l.b16 %v1176
    %v1894 = vunpack.c.l.b16 %v1177
    %v1895 = vunpack.c.h.b16 %v1177
    %v1896 = vunpack.c.l.b16 %v1178
    %v1897 = vunpack.c.h.b16 %v1178
    %v1898 = vunpack.c.l.b16 %v1179
    %v1899 = vunpack.c.h.b16 %v1179
    %v1900 = vunpack.c.l.b16 %v1180
    %v1901 = vunpack.c.l.b16 %v1181
    %v1902 = vunpack.c.h.b16 %v1181
    %v1903 = vunpack.c.l.b16 %v1182
    %v1904 = vunpack.c.h.b16 %v1182
    %v1905 = vunpack.c.l.b16 %v1183
    %v1906 = vunpack.c.h.b16 %v1183
    %v1907 = vunpack.c.l.b16 %v1184
    %v1908 = vunpack.c.l.b16 %v1185
    %v1909 = vunpack.c.h.b16 %v1185
    %v1910 = vunpack.c.l.b16 %v1186
    %v1911 = vunpack.c.h.b16 %v1186
    %v1912 = vunpack.c.l.b16 %v1187
    %v1913 = vunpack.c.h.b16 %v1187
    %v1914 = vunpack.c.l.b16 %v1188
    %v1915 = vunpack.c.l.b16 %v1189
    %v1916 = vunpack.c.h.b16 %v1189
    %v1917 = vunpack.c.l.b16 %v1190
    %v1918 = vunpack.c.h.b16 %v1190
    %v1919 = vunpack.c.l.b16 %v1191
    %v1920 = vunpack.c.h.b16 %v1191
    %v1921 = vunpack.c.l.b16 %v1192
    %v1922 = vunpack.c.l.b16 %v1193
    %v1923 = vunpack.c.h.b16 %v1193
    %v1924 = vunpack.c.l.b16 %v1194
    %v1925 = vunpack.c.h.b16 %v1194
    %v1926 = vunpack.c.l.b16 %v1195
    %v1927 = vunpack.c.h.b16 %v1195
    %v1928 = vunpack.c.l.b16 %v1196
    %v1929 = vunpack.c.l.b16 %v1197
    %v1930 = vunpack.c.h.b16 %v1197
    %v1931 = vunpack.c.l.b16 %v1198
    %v1932 = vunpack.c.h.b16 %v1198
    %v1933 = vunpack.c.l.b16 %v1199
    %v1934 = vunpack.c.h.b16 %v1199
    %v1935 = vunpack.c.l.b16 %v1200
    %v1936 = vunpack.c.l.b16 %v1201
    %v1937 = vunpack.c.h.b16 %v1201
    %v1938 = vunpack.c.l.b16 %v1202
    %v1939 = vunpack.c.h.b16 %v1202
    %v1940 = vunpack.c.l.b16 %v1203
    %v1941 = vunpack.c.h.b16 %v1203
    %v1942 = vunpack.c.l.b16 %v1204
    %v1943 = vunpack.c.l.b16 %v1205
    %v1944 = vunpack.c.h.b16 %v1205
    %v1945 = vunpack.c.l.b16 %v1206
    %v1946 = vunpack.c.h.b16 %v1206
    %v1947 = vunpack.c.l.b16 %v1207
    %v1948 = vunpack.c.h.b16 %v1207
    %v1949 = vunpack.c.l.b16 %v1208
    %v1950 = vpack.c.b16 %v1509, %v1502
    %v1951 = vpack.c.b16 %v1510, %v1503
    %v1952 = vpack.c.b16 %v1511, %v1504
    %v1953 = vpack.c.b16 %v1512, %v1505
    %v1954 = vpack.c.b16 %v1513, %v1506
    %v1955 = vpack.c.b16 %v1514, %v1507
    %v1956 = vpack.c.b16 %v1515, %v1508
    %v1957 = vpack.c.b16 %v1523, %v1516
    %v1958 = vpack.c.b16 %v1524, %v1517
    %v1959 = vpack.c.b16 %v1525, %v1518
    %v1960 = vpack.c.b16 %v1526, %v1519
    %v1961 = vpack.c.b16 %v1527, %v1520
    %v1962 = vpack.c.b16 %v1528, %v1521
    %v1963 = vpack.c.b16 %v1529, %v1522
    %v1964 = vpack.c.b16 %v1537, %v1530
    %v1965 = vpack.c.b16 %v1538, %v1531
    %v1966 = vpack.c.b16 %v1539, %v1532
    %v1967 = vpack.c.b16 %v1540, %v1533
    %v1968 = vpack.c.b16 %v1541, %v1534
    %v1969 = vpack.c.b16 %v1542, %v1535
    %v1970 = vpack.c.b16 %v1543, %v1536
    %v1971 = vpack.c.b16 %v1551, %v1544
    %v1972 = vpack.c.b16 %v1552, %v1545
    %v1973 = vpack.c.b16 %v1553, %v1546
    %v1974 = vpack.c.b16 %v1554, %v1547
    %v1975 = vpack.c.b16 %v1555, %v1548
    %v1976 = vpack.c.b16 %v1556, %v1549
    %v1977 = vpack.c.b16 %v1557, %v1550
    %v1978 = vpack.c.b16 %v1565, %v1558
    %v1979 = vpack.c.b16 %v1566, %v1559
    %v1980 = vpack.c.b16 %v1567, %v1560
    %v1981 = vpack.c.b16 %v1568, %v1561
    %v1982 = vpack.c.b16 %v1569, %v1562
    %v1983 = vpack.c.b16 %v1570, %v1563
    %v1984 = vpack.c.b16 %v1571, %v1564
    %v1985 = vpack.c.b16 %v1579, %v1572
    %v1986 = vpack.c.b16 %v1580, %v1573
    %v1987 = vpack.c.b16 %v1581, %v1574
    %v1988 = vpack.c.b16 %v1582, %v1575
    %v1989 = vpack.c.b16 %v1583, %v1576
    %v1990 = vpack.c.b16 %v1584, %v1577
    %v1991 = vpack.c.b16 %v1585, %v1578
    %v1992 = vpack.c.b16 %v1593, %v1586
    %v1993 = vpack.c.b16 %v1594, %v1587
    %v1994 = vpack.c.b16 %v1595, %v1588
    %v1995 = vpack.c.b16 %v1596, %v1589
    %v1996 = vpack.c.b16 %v1597, %v1590
    %v1997 = vpack.c.b16 %v1598, %v1591
    %v1998 = vpack.c.b16 %v1599, %v1592
    %v1999 = vpack.c.b16 %v1607, %v1600
    %v2000 = vpack.c.b16 %v1608, %v1601
    %v2001 = vpack.c.b16 %v1609, %v1602
    %v2002 = vpack.c.b16 %v1610, %v1603
    %v2003 = vpack.c.b16 %v1611, %v1604
    %v2004 = vpack.c.b16 %v1612, %v1605
    %v2005 = vpack.c.b16 %v1613, %v1606
    %v2006 = vpack.c.b16 %v1621, %v1614
    %v2007 = vpack.c.b16 %v1622, %v1615
    %v2008 = vpack.c.b16 %v1623, %v1616
    %v2009 = vpack.c.b16 %v1624, %v1617
    %v2010 = vpack.c.b16 %v1625, %v1618
    %v2011 = vpack.c.b16 %v1626, %v1619
    %v2012 = vpack.c.b16 %v1627, %v1620
    %v2013 = vpack.c.b16 %v1635, %v1628
    %v2014 = vpack.c.b16 %v1636, %v1629
    %v2015 = vpack.c.b16 %v1637, %v1630
    %v2016 = vpack.c.b16 %v1638, %v1631
    %v2017 = vpack.c.b16 %v1639, %v1632
    %v2018 = vpack.c.b16 %v1640, %v1633
    %v2019 = vpack.c.b16 %v1641, %v1634
    %v2020 = vpack.c.b16 %v1649, %v1642
    %v2021 = vpack.c.b16 %v1650, %v1643
    %v2022 = vpack.c.b16 %v1651, %v1644
    %v2023 = vpack.c.b16 %v1652, %v1645
    %v2024 = vpack.c.b16 %v1653, %v1646
    %v2025 = vpack.c.b16 %v1654, %v1647
    %v2026 = vpack.c.b16 %v1655, %v1648
    %v2027 = vpack.c.b16 %v1663, %v1656
    %v2028 = vpack.c.b16 %v1664, %v1657
    %v2029 = vpack.c.b16 %v1665, %v1658
    %v2030 = vpack.c.b16 %v1666, %v1659
    %v2031 = vpack.c.b16 %v1667, %v1660
    %v2032 = vpack.c.b16 %v1668, %v1661
    %v2033 = vpack.c.b16 %v1669, %v1662
    %v2034 = vpack.c.b16 %v1677, %v1670
    %v2035 = vpack.c.b16 %v1678, %v1671
    %v2036 = vpack.c.b16 %v1679, %v1672
    %v2037 = vpack.c.b16 %v1680, %v1673
    %v2038 = vpack.c.b16 %v1681, %v1674
    %v2039 = vpack.c.b16 %v1682, %v1675
    %v2040 = vpack.c.b16 %v1683, %v1676
    %v2041 = vpack.c.b16 %v1691, %v1684
    %v2042 = vpack.c.b16 %v1692, %v1685
    %v2043 = vpack.c.b16 %v1693, %v1686
    %v2044 = vpack.c.b16 %v1694, %v1687
    %v2045 = vpack.c.b16 %v1695, %v1688
    %v2046 = vpack.c.b16 %v1696, %v1689
    %v2047 = vpack.c.b16 %v1697, %v1690
    %v2048 = vpack.c.b16 %v1705, %v1698
    %v2049 = vpack.c.b16 %v1706, %v1699
    %v2050 = vpack.c.b16 %v1707, %v1700
    %v2051 = vpack.c.b16 %v1708, %v1701
    %v2052 = vpack.c.b16 %v1709, %v1702
    %v2053 = vpack.c.b16 %v1710, %v1703
    %v2054 = vpack.c.b16 %v1711, %v1704
    %v2055 = vpack.c.b16 %v1719, %v1712
    %v2056 = vpack.c.b16 %v1720, %v1713
    %v2057 = vpack.c.b16 %v1721, %v1714
    %v2058 = vpack.c.b16 %v1722, %v1715
    %v2059 = vpack.c.b16 %v1723, %v1716
    %v2060 = vpack.c.b16 %v1724, %v1717
    %v2061 = vpack.c.b16 %v1725, %v1718
    %v2062 = vpack.c.b16 %v1733, %v1726
    %v2063 = vpack.c.b16 %v1734, %v1727
    %v2064 = vpack.c.b16 %v1735, %v1728
    %v2065 = vpack.c.b16 %v1736, %v1729
    %v2066 = vpack.c.b16 %v1737, %v1730
    %v2067 = vpack.c.b16 %v1738, %v1731
    %v2068 = vpack.c.b16 %v1739, %v1732
    %v2069 = vpack.c.b16 %v1747, %v1740
    %v2070 = vpack.c.b16 %v1748, %v1741
    %v2071 = vpack.c.b16 %v1749, %v1742
    %v2072 = vpack.c.b16 %v1750, %v1743
    %v2073 = vpack.c.b16 %v1751, %v1744
    %v2074 = vpack.c.b16 %v1752, %v1745
    %v2075 = vpack.c.b16 %v1753, %v1746
    %v2076 = vpack.c.b16 %v1761, %v1754
    %v2077 = vpack.c.b16 %v1762, %v1755
    %v2078 = vpack.c.b16 %v1763, %v1756
    %v2079 = vpack.c.b16 %v1764, %v1757
    %v2080 = vpack.c.b16 %v1765, %v1758
    %v2081 = vpack.c.b16 %v1766, %v1759
    %v2082 = vpack.c.b16 %v1767, %v1760
    %v2083 = vpack.c.b16 %v1775, %v1768
    %v2084 = vpack.c.b16 %v1776, %v1769
    %v2085 = vpack.c.b16 %v1777, %v1770
    %v2086 = vpack.c.b16 %v1778, %v1771
    %v2087 = vpack.c.b16 %v1779, %v1772
    %v2088 = vpack.c.b16 %v1780, %v1773
    %v2089 = vpack.c.b16 %v1781, %v1774
    %v2090 = vpack.c.b16 %v1789, %v1782
    %v2091 = vpack.c.b16 %v1790, %v1783
    %v2092 = vpack.c.b16 %v1791, %v1784
    %v2093 = vpack.c.b16 %v1792, %v1785
    %v2094 = vpack.c.b16 %v1793, %v1786
    %v2095 = vpack.c.b16 %v1794, %v1787
    %v2096 = vpack.c.b16 %v1795, %v1788
    %v2097 = vpack.c.b16 %v1803, %v1796
    %v2098 = vpack.c.b16 %v1804, %v1797
    %v2099 = vpack.c.b16 %v1805, %v1798
    %v2100 = vpack.c.b16 %v1806, %v1799
    %v2101 = vpack.c.b16 %v1807, %v1800
    %v2102 = vpack.c.b16 %v1808, %v1801
    %v2103 = vpack.c.b16 %v1809, %v1802
    %v2104 = vpack.c.b16 %v1817, %v1810
    %v2105 = vpack.c.b16 %v1818, %v1811
    %v2106 = vpack.c.b16 %v1819, %v1812
    %v2107 = vpack.c.b16 %v1820, %v1813
    %v2108 = vpack.c.b16 %v1821, %v1814
    %v2109 = vpack.c.b16 %v1822, %v1815
    %v2110 = vpack.c.b16 %v1823, %v1816
    %v2111 = vpack.c.b16 %v1831, %v1824
    %v2112 = vpack.c.b16 %v1832, %v1825
    %v2113 = vpack.c.b16 %v1833, %v1826
    %v2114 = vpack.c.b16 %v1834, %v1827
    %v2115 = vpack.c.b16 %v1835, %v1828
    %v2116 = vpack.c.b16 %v1836, %v1829
    %v2117 = vpack.c.b16 %v1837, %v1830
    %v2118 = vpack.c.b16 %v1845, %v1838
    %v2119 = vpack.c.b16 %v1846, %v1839
    %v2120 = vpack.c.b16 %v1847, %v1840
    %v2121 = vpack.c.b16 %v1848, %v1841
    %v2122 = vpack.c.b16 %v1849, %v1842
    %v2123 = vpack.c.b16 %v1850, %v1843
    %v2124 = vpack.c.b16 %v1851, %v1844
    %v2125 = vpack.c.b16 %v1859, %v1852
    %v2126 = vpack.c.b16 %v1860, %v1853
    %v2127 = vpack.c.b16 %v1861, %v1854
    %v2128 = vpack.c.b16 %v1862, %v1855
    %v2129 = vpack.c.b16 %v1863, %v1856
    %v2130 = vpack.c.b16 %v1864, %v1857
    %v2131 = vpack.c.b16 %v1865, %v1858
    %v2132 = vpack.c.b16 %v1873, %v1866
    %v2133 = vpack.c.b16 %v1874, %v1867
    %v2134 = vpack.c.b16 %v1875, %v1868
    %v2135 = vpack.c.b16 %v1876, %v1869
    %v2136 = vpack.c.b16 %v1877, %v1870
    %v2137 = vpack.c.b16 %v1878, %v1871
    %v2138 = vpack.c.b16 %v1879, %v1872
    %v2139 = vpack.c.b16 %v1887, %v1880
    %v2140 = vpack.c.b16 %v1888, %v1881
    %v2141 = vpack.c.b16 %v1889, %v1882
    %v2142 = vpack.c.b16 %v1890, %v1883
    %v2143 = vpack.c.b16 %v1891, %v1884
    %v2144 = vpack.c.b16 %v1892, %v1885
    %v2145 = vpack.c.b16 %v1893, %v1886
    %v2146 = vpack.c.b16 %v1901, %v1894
    %v2147 = vpack.c.b16 %v1902, %v1895
    %v2148 = vpack.c.b16 %v1903, %v1896
    %v2149 = vpack.c.b16 %v1904, %v1897
    %v2150 = vpack.c.b16 %v1905, %v1898
    %v2151 = vpack.c.b16 %v1906, %v1899
    %v2152 = vpack.c.b16 %v1907, %v1900
    %v2153 = vpack.c.b16 %v1915, %v1908
    %v2154 = vpack.c.b16 %v1916, %v1909
    %v2155 = vpack.c.b16 %v1917, %v1910
    %v2156 = vpack.c.b16 %v1918, %v1911
    %v2157 = vpack.c.b16 %v1919, %v1912
    %v2158 = vpack.c.b16 %v1920, %v1913
    %v2159 = vpack.c.b16 %v1921, %v1914
    %v2160 = vpack.c.b16 %v1929, %v1922
    %v2161 = vpack.c.b16 %v1930, %v1923
    %v2162 = vpack.c.b16 %v1931, %v1924
    %v2163 = vpack.c.b16 %v1932, %v1925
    %v2164 = vpack.c.b16 %v1933, %v1926
    %v2165 = vpack.c.b16 %v1934, %v1927
    %v2166 = vpack.c.b16 %v1935, %v1928
    %v2167 = vpack.c.b16 %v1943, %v1936
    %v2168 = vpack.c.b16 %v1944, %v1937
    %v2169 = vpack.c.b16 %v1945, %v1938
    %v2170 = vpack.c.b16 %v1946, %v1939
    %v2171 = vpack.c.b16 %v1947, %v1940
    %v2172 = vpack.c.b16 %v1948, %v1941
    %v2173 = vpack.c.b16 %v1949, %v1942
    %2398 = vmatprep.subr.bf16.mxu0 %v1951
    %2399 = vmatpush1.bf16.msra.mxu0 %v1950
    %2400 = vmatprep.subr.bf16.mxu0 %v1958
    %2401 = vmatpush1.bf16.msra.mxu0 %v1957
    %2402 = vmatprep.subr.bf16.mxu0 %v1965
    %2403 = vmatpush1.bf16.msra.mxu0 %v1964
    %2404 = vmatprep.subr.bf16.mxu0 %v1972
    %2405 = vmatpush1.bf16.msra.mxu0 %v1971
    %2406 = vmatprep.subr.bf16.mxu0 %v1979
    %2407 = vmatpush1.bf16.msra.mxu0 %v1978
    %2408 = vmatprep.subr.bf16.mxu0 %v1986
    %2409 = vmatpush1.bf16.msra.mxu0 %v1985
    %2410 = vmatprep.subr.bf16.mxu0 %v1993
    %2411 = vmatpush1.bf16.msra.mxu0 %v1992
    %2412 = vmatprep.subr.bf16.mxu0 %v2000
    %2413 = vmatpush1.bf16.msra.mxu0 %v1999
    %2414 = vmatprep.subr.bf16.mxu0 %v2007
    %2415 = vmatpush1.bf16.msra.mxu0 %v2006
    %2416 = vmatprep.subr.bf16.mxu0 %v2014
    %2417 = vmatpush1.bf16.msra.mxu0 %v2013
    %2418 = vmatprep.subr.bf16.mxu0 %v2021
    %2419 = vmatpush1.bf16.msra.mxu0 %v2020
    %2420 = vmatprep.subr.bf16.mxu0 %v2028
    %2421 = vmatpush1.bf16.msra.mxu0 %v2027
    %2422 = vmatprep.subr.bf16.mxu0 %v2035
    %2423 = vmatpush1.bf16.msra.mxu0 %v2034
    %2424 = vmatprep.subr.bf16.mxu0 %v2042
    %2425 = vmatpush1.bf16.msra.mxu0 %v2041
    %2426 = vmatprep.subr.bf16.mxu0 %v2049
    %2427 = vmatpush1.bf16.msra.mxu0 %v2048
    %2428 = vmatprep.subr.bf16.mxu0 %v2056
    %2429 = vmatpush1.bf16.msra.mxu0 %v2055
    %2430 = vmatprep.mubr.bf16.mxu0 %v950
    %2431 = vmatmul.mubr.bf16.gmra.mrb[0].mxu0 %v949
    %v2432 = vpop.f32.mrb[0].mxu0
    %v2433 = vadd.f32 %v1214, %v2432
    %v2434 = vpop.f32.mrb[0].mxu0
    %v2435 = vadd.f32 %v1218, %v2434
    %v2436 = vpop.f32.mrb[0].mxu0
    %v2437 = vpop.f32.mrb[0].mxu0
    %2438 = vdwg.mxu0
    %2439 = vmatprep.subr.bf16.mxu0 %v2063
    %2440 = vmatpush1.bf16.msra.mxu0 %v2062
    %2441 = vmatprep.subr.bf16.mxu0 %v2070
    %2442 = vmatpush1.bf16.msra.mxu0 %v2069
    %2443 = vmatprep.subr.bf16.mxu0 %v2077
    %2444 = vmatpush1.bf16.msra.mxu0 %v2076
    %2445 = vmatprep.subr.bf16.mxu0 %v2084
    %2446 = vmatpush1.bf16.msra.mxu0 %v2083
    %2447 = vmatprep.subr.bf16.mxu0 %v2091
    %2448 = vmatpush1.bf16.msra.mxu0 %v2090
    %2449 = vmatprep.subr.bf16.mxu0 %v2098
    %2450 = vmatpush1.bf16.msra.mxu0 %v2097
    %2451 = vmatprep.subr.bf16.mxu0 %v2105
    %2452 = vmatpush1.bf16.msra.mxu0 %v2104
    %2453 = vmatprep.subr.bf16.mxu0 %v2112
    %2454 = vmatpush1.bf16.msra.mxu0 %v2111
    %2455 = vmatprep.subr.bf16.mxu0 %v2119
    %2456 = vmatpush1.bf16.msra.mxu0 %v2118
    %2457 = vmatprep.subr.bf16.mxu0 %v2126
    %2458 = vmatpush1.bf16.msra.mxu0 %v2125
    %2459 = vmatprep.subr.bf16.mxu0 %v2133
    %2460 = vmatpush1.bf16.msra.mxu0 %v2132
    %2461 = vmatprep.subr.bf16.mxu0 %v2140
    %2462 = vmatpush1.bf16.msra.mxu0 %v2139
    %2463 = vmatprep.subr.bf16.mxu0 %v2147
    %2464 = vmatpush1.bf16.msra.mxu0 %v2146
    %2465 = vmatprep.subr.bf16.mxu0 %v2154
    %2466 = vmatpush1.bf16.msra.mxu0 %v2153
    %2467 = vmatprep.subr.bf16.mxu0 %v2161
    %2468 = vmatpush1.bf16.msra.mxu0 %v2160
    %2469 = vmatprep.subr.bf16.mxu0 %v2168
    %2470 = vmatpush1.bf16.msra.mxu0 %v2167
    %2471 = vmatprep.mubr.bf16.mxu0 %v952
    %2472 = vmatmul.mubr.bf16.gmra.mrb[0].mxu0 %v951
    %v2473 = vpop.f32.mrb[0].mxu0
    %v2474 = vadd.f32 %v2433, %v2473
    %v2475 = vpop.f32.mrb[0].mxu0
    %v2476 = vadd.f32 %v2435, %v2475
    %v2477 = vpop.f32.mrb[0].mxu0
    %v2478 = vpop.f32.mrb[0].mxu0
    %2479 = vdwg.mxu0
    %2480 = vmatprep.subr.bf16.mxu0 %v1953
    %2481 = vmatpush1.bf16.msra.mxu0 %v1952
    %2482 = vmatprep.subr.bf16.mxu0 %v1960
    %2483 = vmatpush1.bf16.msra.mxu0 %v1959
    %2484 = vmatprep.subr.bf16.mxu0 %v1967
    %2485 = vmatpush1.bf16.msra.mxu0 %v1966
    %2486 = vmatprep.subr.bf16.mxu0 %v1974
    %2487 = vmatpush1.bf16.msra.mxu0 %v1973
    %2488 = vmatprep.subr.bf16.mxu0 %v1981
    %2489 = vmatpush1.bf16.msra.mxu0 %v1980
    %2490 = vmatprep.subr.bf16.mxu0 %v1988
    %2491 = vmatpush1.bf16.msra.mxu0 %v1987
    %2492 = vmatprep.subr.bf16.mxu0 %v1995
    %2493 = vmatpush1.bf16.msra.mxu0 %v1994
    %2494 = vmatprep.subr.bf16.mxu0 %v2002
    %2495 = vmatpush1.bf16.msra.mxu0 %v2001
    %2496 = vmatprep.subr.bf16.mxu0 %v2009
    %2497 = vmatpush1.bf16.msra.mxu0 %v2008
    %2498 = vmatprep.subr.bf16.mxu0 %v2016
    %2499 = vmatpush1.bf16.msra.mxu0 %v2015
    %2500 = vmatprep.subr.bf16.mxu0 %v2023
    %2501 = vmatpush1.bf16.msra.mxu0 %v2022
    %2502 = vmatprep.subr.bf16.mxu0 %v2030
    %2503 = vmatpush1.bf16.msra.mxu0 %v2029
    %2504 = vmatprep.subr.bf16.mxu0 %v2037
    %2505 = vmatpush1.bf16.msra.mxu0 %v2036
    %2506 = vmatprep.subr.bf16.mxu0 %v2044
    %2507 = vmatpush1.bf16.msra.mxu0 %v2043
    %2508 = vmatprep.subr.bf16.mxu0 %v2051
    %2509 = vmatpush1.bf16.msra.mxu0 %v2050
    %2510 = vmatprep.subr.bf16.mxu0 %v2058
    %2511 = vmatpush1.bf16.msra.mxu0 %v2057
    %2512 = vmatprep.mubr.bf16.mxu0 %v950
    %2513 = vmatmul.mubr.bf16.gmra.mrb[0].mxu0 %v949
    %v2514 = vpop.f32.mrb[0].mxu0
    %v2515 = vadd.f32 %v1222, %v2514
    %v2516 = vpop.f32.mrb[0].mxu0
    %v2517 = vadd.f32 %v1226, %v2516
    %v2518 = vpop.f32.mrb[0].mxu0
    %v2519 = vpop.f32.mrb[0].mxu0
    %2520 = vdwg.mxu0
    %2521 = vmatprep.subr.bf16.mxu0 %v2065
    %2522 = vmatpush1.bf16.msra.mxu0 %v2064
    %2523 = vmatprep.subr.bf16.mxu0 %v2072
    %2524 = vmatpush1.bf16.msra.mxu0 %v2071
    %2525 = vmatprep.subr.bf16.mxu0 %v2079
    %2526 = vmatpush1.bf16.msra.mxu0 %v2078
    %2527 = vmatprep.subr.bf16.mxu0 %v2086
    %2528 = vmatpush1.bf16.msra.mxu0 %v2085
    %2529 = vmatprep.subr.bf16.mxu0 %v2093
    %2530 = vmatpush1.bf16.msra.mxu0 %v2092
    %2531 = vmatprep.subr.bf16.mxu0 %v2100
    %2532 = vmatpush1.bf16.msra.mxu0 %v2099
    %2533 = vmatprep.subr.bf16.mxu0 %v2107
    %2534 = vmatpush1.bf16.msra.mxu0 %v2106
    %2535 = vmatprep.subr.bf16.mxu0 %v2114
    %2536 = vmatpush1.bf16.msra.mxu0 %v2113
    %2537 = vmatprep.subr.bf16.mxu0 %v2121
    %2538 = vmatpush1.bf16.msra.mxu0 %v2120
    %2539 = vmatprep.subr.bf16.mxu0 %v2128
    %2540 = vmatpush1.bf16.msra.mxu0 %v2127
    %2541 = vmatprep.subr.bf16.mxu0 %v2135
    %2542 = vmatpush1.bf16.msra.mxu0 %v2134
    %2543 = vmatprep.subr.bf16.mxu0 %v2142
    %2544 = vmatpush1.bf16.msra.mxu0 %v2141
    %2545 = vmatprep.subr.bf16.mxu0 %v2149
    %2546 = vmatpush1.bf16.msra.mxu0 %v2148
    %2547 = vmatprep.subr.bf16.mxu0 %v2156
    %2548 = vmatpush1.bf16.msra.mxu0 %v2155
    %2549 = vmatprep.subr.bf16.mxu0 %v2163
    %2550 = vmatpush1.bf16.msra.mxu0 %v2162
    %2551 = vmatprep.subr.bf16.mxu0 %v2170
    %2552 = vmatpush1.bf16.msra.mxu0 %v2169
    %2553 = vmatprep.mubr.bf16.mxu0 %v952
    %2554 = vmatmul.mubr.bf16.gmra.mrb[0].mxu0 %v951
    %v2555 = vpop.f32.mrb[0].mxu0
    %v2556 = vadd.f32 %v2515, %v2555
    %v2557 = vpop.f32.mrb[0].mxu0
    %v2558 = vadd.f32 %v2517, %v2557
    %v2559 = vpop.f32.mrb[0].mxu0
    %v2560 = vpop.f32.mrb[0].mxu0
    %2561 = vdwg.mxu0
    %2562 = vmatprep.subr.bf16.mxu0 %v1955
    %2563 = vmatpush1.bf16.msra.mxu0 %v1954
    %2564 = vmatprep.subr.bf16.mxu0 %v1962
    %2565 = vmatpush1.bf16.msra.mxu0 %v1961
    %2566 = vmatprep.subr.bf16.mxu0 %v1969
    %2567 = vmatpush1.bf16.msra.mxu0 %v1968
    %2568 = vmatprep.subr.bf16.mxu0 %v1976
    %2569 = vmatpush1.bf16.msra.mxu0 %v1975
    %2570 = vmatprep.subr.bf16.mxu0 %v1983
    %2571 = vmatpush1.bf16.msra.mxu0 %v1982
    %2572 = vmatprep.subr.bf16.mxu0 %v1990
    %2573 = vmatpush1.bf16.msra.mxu0 %v1989
    %2574 = vmatprep.subr.bf16.mxu0 %v1997
    %2575 = vmatpush1.bf16.msra.mxu0 %v1996
    %2576 = vmatprep.subr.bf16.mxu0 %v2004
    %2577 = vmatpush1.bf16.msra.mxu0 %v2003
    %2578 = vmatprep.subr.bf16.mxu0 %v2011
    %2579 = vmatpush1.bf16.msra.mxu0 %v2010
    %2580 = vmatprep.subr.bf16.mxu0 %v2018
    %2581 = vmatpush1.bf16.msra.mxu0 %v2017
    %2582 = vmatprep.subr.bf16.mxu0 %v2025
    %2583 = vmatpush1.bf16.msra.mxu0 %v2024
    %2584 = vmatprep.subr.bf16.mxu0 %v2032
    %2585 = vmatpush1.bf16.msra.mxu0 %v2031
    %2586 = vmatprep.subr.bf16.mxu0 %v2039
    %2587 = vmatpush1.bf16.msra.mxu0 %v2038
    %2588 = vmatprep.subr.bf16.mxu0 %v2046
    %2589 = vmatpush1.bf16.msra.mxu0 %v2045
    %2590 = vmatprep.subr.bf16.mxu0 %v2053
    %2591 = vmatpush1.bf16.msra.mxu0 %v2052
    %2592 = vmatprep.subr.bf16.mxu0 %v2060
    %2593 = vmatpush1.bf16.msra.mxu0 %v2059
    %2594 = vmatprep.mubr.bf16.mxu0 %v950
    %2595 = vmatmul.mubr.bf16.gmra.mrb[0].mxu0 %v949
    %v2596 = vpop.f32.mrb[0].mxu0
    %v2597 = vadd.f32 %v1230, %v2596
    %v2598 = vpop.f32.mrb[0].mxu0
    %v2599 = vadd.f32 %v1234, %v2598
    %v2600 = vpop.f32.mrb[0].mxu0
    %v2601 = vpop.f32.mrb[0].mxu0
    %2602 = vdwg.mxu0
    %2603 = vmatprep.subr.bf16.mxu0 %v2067
    %2604 = vmatpush1.bf16.msra.mxu0 %v2066
    %2605 = vmatprep.subr.bf16.mxu0 %v2074
    %2606 = vmatpush1.bf16.msra.mxu0 %v2073
    %2607 = vmatprep.subr.bf16.mxu0 %v2081
    %2608 = vmatpush1.bf16.msra.mxu0 %v2080
    %2609 = vmatprep.subr.bf16.mxu0 %v2088
    %2610 = vmatpush1.bf16.msra.mxu0 %v2087
    %2611 = vmatprep.subr.bf16.mxu0 %v2095
    %2612 = vmatpush1.bf16.msra.mxu0 %v2094
    %2613 = vmatprep.subr.bf16.mxu0 %v2102
    %2614 = vmatpush1.bf16.msra.mxu0 %v2101
    %2615 = vmatprep.subr.bf16.mxu0 %v2109
    %2616 = vmatpush1.bf16.msra.mxu0 %v2108
    %2617 = vmatprep.subr.bf16.mxu0 %v2116
    %2618 = vmatpush1.bf16.msra.mxu0 %v2115
    %2619 = vmatprep.subr.bf16.mxu0 %v2123
    %2620 = vmatpush1.bf16.msra.mxu0 %v2122
    %2621 = vmatprep.subr.bf16.mxu0 %v2130
    %2622 = vmatpush1.bf16.msra.mxu0 %v2129
    %2623 = vmatprep.subr.bf16.mxu0 %v2137
    %2624 = vmatpush1.bf16.msra.mxu0 %v2136
    %2625 = vmatprep.subr.bf16.mxu0 %v2144
    %2626 = vmatpush1.bf16.msra.mxu0 %v2143
    %2627 = vmatprep.subr.bf16.mxu0 %v2151
    %2628 = vmatpush1.bf16.msra.mxu0 %v2150
    %2629 = vmatprep.subr.bf16.mxu0 %v2158
    %2630 = vmatpush1.bf16.msra.mxu0 %v2157
    %2631 = vmatprep.subr.bf16.mxu0 %v2165
    %2632 = vmatpush1.bf16.msra.mxu0 %v2164
    %2633 = vmatprep.subr.bf16.mxu0 %v2172
    %2634 = vmatpush1.bf16.msra.mxu0 %v2171
    %2635 = vmatprep.mubr.bf16.mxu0 %v952
    %2636 = vmatmul.mubr.bf16.gmra.mrb[0].mxu0 %v951
    %v2637 = vpop.f32.mrb[0].mxu0
    %v2638 = vadd.f32 %v2597, %v2637
    %v2639 = vpop.f32.mrb[0].mxu0
    %v2640 = vadd.f32 %v2599, %v2639
    %v2641 = vpop.f32.mrb[0].mxu0
    %v2642 = vpop.f32.mrb[0].mxu0
    %2643 = vdwg.mxu0
    %2644 = vmatprep.subr.bf16.mxu0 0
    %2645 = vmatpush1.bf16.msra.mxu0 %v1956
    %2646 = vmatprep.subr.bf16.mxu0 0
    %2647 = vmatpush1.bf16.msra.mxu0 %v1963
    %2648 = vmatprep.subr.bf16.mxu0 0
    %2649 = vmatpush1.bf16.msra.mxu0 %v1970
    %2650 = vmatprep.subr.bf16.mxu0 0
    %2651 = vmatpush1.bf16.msra.mxu0 %v1977
    %2652 = vmatprep.subr.bf16.mxu0 0
    %2653 = vmatpush1.bf16.msra.mxu0 %v1984
    %2654 = vmatprep.subr.bf16.mxu0 0
    %2655 = vmatpush1.bf16.msra.mxu0 %v1991
    %2656 = vmatprep.subr.bf16.mxu0 0
    %2657 = vmatpush1.bf16.msra.mxu0 %v1998
    %2658 = vmatprep.subr.bf16.mxu0 0
    %2659 = vmatpush1.bf16.msra.mxu0 %v2005
    %2660 = vmatprep.subr.bf16.mxu0 0
    %2661 = vmatpush1.bf16.msra.mxu0 %v2012
    %2662 = vmatprep.subr.bf16.mxu0 0
    %2663 = vmatpush1.bf16.msra.mxu0 %v2019
    %2664 = vmatprep.subr.bf16.mxu0 0
    %2665 = vmatpush1.bf16.msra.mxu0 %v2026
    %2666 = vmatprep.subr.bf16.mxu0 0
    %2667 = vmatpush1.bf16.msra.mxu0 %v2033
    %2668 = vmatprep.subr.bf16.mxu0 0
    %2669 = vmatpush1.bf16.msra.mxu0 %v2040
    %2670 = vmatprep.subr.bf16.mxu0 0
    %2671 = vmatpush1.bf16.msra.mxu0 %v2047
    %2672 = vmatprep.subr.bf16.mxu0 0
    %2673 = vmatpush1.bf16.msra.mxu0 %v2054
    %2674 = vmatprep.subr.bf16.mxu0 0
    %2675 = vmatpush1.bf16.msra.mxu0 %v2061
    %2676 = vmatprep.mubr.bf16.mxu0 %v950
    %2677 = vmatmul.mubr.bf16.gmra.mrb[0].mxu0 %v949
    %v2678 = vpop.f32.mrb[0].mxu0
    %v2679 = vadd.f32 %v1238, %v2678
    %v2680 = vpop.f32.mrb[0].mxu0
    %v2681 = vpop.f32.mrb[0].mxu0
    %v2682 = vpop.f32.mrb[0].mxu0
    %2683 = vdwg.mxu0
    %2684 = vmatprep.subr.bf16.mxu0 0
    %2685 = vmatpush1.bf16.msra.mxu0 %v2068
    %2686 = vmatprep.subr.bf16.mxu0 0
    %2687 = vmatpush1.bf16.msra.mxu0 %v2075
    %2688 = vmatprep.subr.bf16.mxu0 0
    %2689 = vmatpush1.bf16.msra.mxu0 %v2082
    %2690 = vmatprep.subr.bf16.mxu0 0
    %2691 = vmatpush1.bf16.msra.mxu0 %v2089
    %2692 = vmatprep.subr.bf16.mxu0 0
    %2693 = vmatpush1.bf16.msra.mxu0 %v2096
    %2694 = vmatprep.subr.bf16.mxu0 0
    %2695 = vmatpush1.bf16.msra.mxu0 %v2103
    %2696 = vmatprep.subr.bf16.mxu0 0
    %2697 = vmatpush1.bf16.msra.mxu0 %v2110
    %2698 = vmatprep.subr.bf16.mxu0 0
    %2699 = vmatpush1.bf16.msra.mxu0 %v2117
    %2700 = vmatprep.subr.bf16.mxu0 0
    %2701 = vmatpush1.bf16.msra.mxu0 %v2124
    %2702 = vmatprep.subr.bf16.mxu0 0
    %2703 = vmatpush1.bf16.msra.mxu0 %v2131
    %2704 = vmatprep.subr.bf16.mxu0 0
    %2705 = vmatpush1.bf16.msra.mxu0 %v2138
    %2706 = vmatprep.subr.bf16.mxu0 0
    %2707 = vmatpush1.bf16.msra.mxu0 %v2145
    %2708 = vmatprep.subr.bf16.mxu0 0
    %2709 = vmatpush1.bf16.msra.mxu0 %v2152
    %2710 = vmatprep.subr.bf16.mxu0 0
    %2711 = vmatpush1.bf16.msra.mxu0 %v2159
    %2712 = vmatprep.subr.bf16.mxu0 0
    %2713 = vmatpush1.bf16.msra.mxu0 %v2166
    %2714 = vmatprep.subr.bf16.mxu0 0
    %2715 = vmatpush1.bf16.msra.mxu0 %v2173
    %2716 = vmatprep.mubr.bf16.mxu0 %v952
    %2717 = vmatmul.mubr.bf16.gmra.mrb[0].mxu0 %v951
    %v2718 = vpop.f32.mrb[0].mxu0
    %v2719 = vadd.f32 %v2679, %v2718
    %v2720 = vpop.f32.mrb[0].mxu0
    %v2721 = vpop.f32.mrb[0].mxu0
    %v2722 = vpop.f32.mrb[0].mxu0
    %2723 = vdwg.mxu0
    %v2724 = vtanh.pop %v2474
    %v2725 = vtanh.pop %v2476
    %v2726 = vtanh.pop %v2556
    %v2727 = vtanh.pop %v2558
    %v2728 = vtanh.pop %v2638
    %v2729 = vtanh.pop %v2640
    %v2730 = vtanh.pop %v2719
    %2731 = vst [vmem:[#allocation13] sm:$0xff] %v2724
    %2732 = vst [vmem:[#allocation13 + $0x8] sm:$0xff] %v2725
    %2733 = vst [vmem:[#allocation13 + $0x10] sm:$0xff] %v2726
    %2734 = vst [vmem:[#allocation13 + $0x18] sm:$0xff] %v2727
    %2735 = vst [vmem:[#allocation13 + $0x20] sm:$0xff] %v2728
    %2736 = vst [vmem:[#allocation13 + $0x28] sm:$0xff] %v2729
    %2737 = vst [vmem:[#allocation13 + $0x30] sm:$0xff] %v2730
    // Predicated region
    $region70: #{tpu_custom_call.1} parent=1 // pred_check
      _
    $region71: #{tpu_custom_call.1} parent=1 // pred_check_branch
      %2739 = sbr.rel (0) target = $region73
    $region72: #{tpu_custom_call.1} parent=1 // pred_region
      %s2741 = ssub.s32 896, 896
      %2742 = vsyncadd [#allocation4], %s2741
      %s2744 = sshll.u32 [#allocation13], 4
      %s2745 = int_to_ptr.vmem [resolvable:$true] %s2744
      %2747 = dma.vmem_to_hbm [thread:$0]  %s2745, 896, %s11, [#allocation4]
    $region73: #{tpu_custom_call.1} parent=1 // pred_fallthru
      _
    // Predicated region
    $region74: #{tpu_custom_call.1} parent=1 // pred_check
      _
    $region75: #{tpu_custom_call.1} parent=1 // pred_check_branch
      %2749 = sbr.rel (0) target = $region77
    $region76: #{tpu_custom_call.1} parent=1 // pred_region
      %2750 = dma.done [#allocation4], 896
    $region77: #{tpu_custom_call.1} parent=1 // pred_fallthru
      _
    %2751 = vsyncpa [#allocation3], 1
    %2752 = vsyncpa [#allocation6], 1
    %2753 = vsyncpa [#allocation9], 1
    %2754 = vsyncpa [#allocation12], 1
    %2755 = vsyncpa [#allocation4], 1

</llo_original>
